<compile_context>
chip_gen: v7x
topology: tpu7x:2x2x1
jax: 0.10.0
libtpu: 0.0.40
codegen_flags: <defaults>
</compile_context>

<pallas_src>
import jax
import jax.numpy as jnp
from jax.experimental import pallas as pl
from jax.experimental.pallas import tpu as pltpu

L_IN = 1277          # input length => conv len 426 => pool len 213 (matches 32*213 flatten)
CONV_LEN = 426
POOL_LEN = 213
N_CH = 32
FEAT = N_CH * POOL_LEN   # 6816
H1, H2 = 64, 32
CG = 8                   # channels per grid step (W1 streamed / double-buffered in CG chunks)
N_GROUPS = N_CH // CG


def _fused_kernel(xt_ref, wc_ref, bc_ref, w1_ref, b1_ref, w2_ref, b2_ref,
                  w3_ref, b3_ref, o_ref, acc_ref):
    # xt_ref : (6, BT, 213) VMEM   xt[3j+k, b, t] = xpad[b, 6t+3j+k]  (j=pool phase, k=tap)
    # wc_ref : (96,)  SMEM         wc[c*3+k] = conv_w[c, 0, k]
    # bc_ref : (32,)  SMEM         conv bias
    # w1_ref : (CG, 64, 213) VMEM  bf16, w1[c, h, t] = W1[h, c*213 + t]  (lane-dense)
    # b1_ref : (1,64)  w2_ref: (64,32)  b2_ref: (1,32)  w3_ref: (1,32)  b3_ref: (1,) SMEM
    # o_ref  : (BT, 1)             acc_ref: (BT, 64) f32 VMEM scratch
    g = pl.program_id(1)

    @pl.when(g == 0)
    def _():
        acc_ref[...] = jnp.zeros_like(acc_ref)

    taps = [xt_ref[r] for r in range(6)]          # six (BT, 213) lane-dense f32 tiles
    c0 = g * CG
    part = None
    for ci in range(CG):                          # bounded unroll: CG channels per step
        c = c0 + ci
        wk0 = wc_ref[3 * c + 0]
        wk1 = wc_ref[3 * c + 1]
        wk2 = wc_ref[3 * c + 2]
        bch = bc_ref[c]
        p0 = taps[0] * wk0 + taps[1] * wk1 + taps[2] * wk2 + bch   # conv, pool phase 0
        p1 = taps[3] * wk0 + taps[4] * wk1 + taps[5] * wk2 + bch   # conv, pool phase 1
        pooled_c = jnp.maximum(p0, p1).astype(jnp.bfloat16)        # MaxPool1d(2) -> (BT, 213)
        d = jax.lax.dot_general(                                   # (BT,213) x (64,213)^T
            pooled_c, w1_ref[ci],
            dimension_numbers=(((1,), (1,)), ((), ())),
            preferred_element_type=jnp.float32)                    # -> (BT, 64) f32
        part = d if part is None else part + d
    acc_ref[...] += part

    @pl.when(g == pl.num_programs(1) - 1)
    def _():
        h = jnp.maximum(acc_ref[...] + b1_ref[...], 0.0)                           # ReLU
        pre = jnp.dot(h, w2_ref[...], preferred_element_type=jnp.float32) + b2_ref[...]
        # Softplus, numerically stable: relu(x) + log(1 + exp(-|x|))
        sp = jnp.maximum(pre, 0.0) + jnp.log(1.0 + jnp.exp(-jnp.abs(pre)))
        o_ref[...] = jnp.sum(sp * w3_ref[...], axis=-1, keepdims=True) + b3_ref[0]  # Linear(32->1)


def prepare_params(params):
    """One-time re-layout of PyTorch-shaped parameters (hoisted out of the forward)."""
    conv_w, conv_b, w1, b1, w2, b2, w3, b3 = params
    wc = conv_w.reshape(N_CH * 3)                                       # wc[c*3+k] = conv_w[c,0,k]
    # Channel-major, lane-dense, bf16: w1r[c, h, t] = W1[h, c*213 + t]  -> (32, 64, 213)
    w1r = w1.reshape(H1, N_CH, POOL_LEN).transpose(1, 0, 2).astype(jnp.bfloat16)
    return (wc, conv_b, w1r, b1.reshape(1, H1), w2.T, b2.reshape(1, H2), w3, b3)


def mynet_forward(x, prep):
    wc, bc, w1r, b1, w2p, b2, w3, b3 = prep
    B, L = x.shape
    # left-pad-only conv trick is valid exactly when the right pad element is never read:
    assert (L + 2 - 3) // 3 + 1 == CONV_LEN and L + 1 == 6 * POOL_LEN

    # Batch tile: MXU-sized once B is large (parallel axis -> megacore on v7x),
    # otherwise just round B up to a sublane multiple.
    BT = 128 if B >= 128 else ((B + 7) // 8) * 8
    B_pad = ((B + BT - 1) // BT) * BT
    n_bt = B_pad // BT

    # Per-forward glue (~tens of KiB): left pad + rearrange into tap-major (6, B_pad, 213).
    xp = jnp.pad(x, ((0, B_pad - B), (1, 0)))               # (B_pad, 1278)
    xt = xp.reshape(B_pad, POOL_LEN, 6).transpose(2, 0, 1)  # (6, B_pad, 213)

    smem = pltpu.MemorySpace.SMEM
    out = pl.pallas_call(
        _fused_kernel,
        out_shape=jax.ShapeDtypeStruct((B_pad, 1), jnp.float32),
        grid=(n_bt, N_GROUPS),
        in_specs=[
            pl.BlockSpec((6, BT, POOL_LEN), lambda bt, g: (0, bt, 0)),   # xt, resident over g
            pl.BlockSpec(memory_space=smem),                             # conv weights (scalars)
            pl.BlockSpec(memory_space=smem),                             # conv bias (scalars)
            pl.BlockSpec((CG, H1, POOL_LEN), lambda bt, g: (g, 0, 0)),   # W1 bf16, streamed per group
            pl.BlockSpec((1, H1), lambda bt, g: (0, 0)),                 # b1
            pl.BlockSpec((H1, H2), lambda bt, g: (0, 0)),                # w2.T
            pl.BlockSpec((1, H2), lambda bt, g: (0, 0)),                 # b2
            pl.BlockSpec((1, H2), lambda bt, g: (0, 0)),                 # w3
            pl.BlockSpec(memory_space=smem),                             # b3 scalar
        ],
        out_specs=pl.BlockSpec((BT, 1), lambda bt, g: (bt, 0)),
        scratch_shapes=[pltpu.VMEM((BT, H1), jnp.float32)],              # Linear1 accumulator
        compiler_params=pltpu.CompilerParams(
            dimension_semantics=("parallel", "arbitrary")),
    )(xt, wc, bc, w1r, b1, w2p, b2, w3, b3)
    return out[:B, 0]


def init_params(key):
    ks = jax.random.split(key, 8)
    conv_w = 0.1 * jax.random.normal(ks[0], (N_CH, 1, 3), jnp.float32)   # Conv1d(1,32,3)
    conv_b = 0.1 * jax.random.normal(ks[1], (N_CH,), jnp.float32)
    w1 = 0.02 * jax.random.normal(ks[2], (H1, FEAT), jnp.float32)        # Linear(6816,64)
    b1 = 0.02 * jax.random.normal(ks[3], (H1,), jnp.float32)
    w2 = 0.1 * jax.random.normal(ks[4], (H2, H1), jnp.float32)           # Linear(64,32)
    b2 = 0.1 * jax.random.normal(ks[5], (H2,), jnp.float32)
    w3 = 0.1 * jax.random.normal(ks[6], (1, H2), jnp.float32)            # Linear(32,1)
    b3 = 0.1 * jax.random.normal(ks[7], (1,), jnp.float32)
    return (conv_w, conv_b, w1, b1, w2, b2, w3, b3)


def reference(x, params):
    # pure-JAX f32 reference of the PyTorch forward (raw PyTorch-layout params)
    conv_w, conv_b, w1, b1, w2, b2, w3, b3 = params
    B = x.shape[0]
    xp = jnp.pad(x, ((0, 0), (1, 0)))
    xw = xp.reshape(B, CONV_LEN, 3)
    conv = jnp.einsum("btk,ck->bct", xw, conv_w[:, 0, :]) + conv_b[None, :, None]
    pooled = jnp.maximum(conv[:, :, 0::2], conv[:, :, 1::2])              # (B, 32, 213)
    feat = pooled.reshape(B, FEAT)
    h = jnp.maximum(feat @ w1.T + b1, 0.0)
    pre = h @ w2.T + b2
    h2 = jnp.maximum(pre, 0.0) + jnp.log(1.0 + jnp.exp(-jnp.abs(pre)))
    return (h2 @ w3.T + b3).reshape(B)


if __name__ == "__main__":
    key = jax.random.PRNGKey(0)
    kx, kp = jax.random.split(key)
    B = 8
    x = jax.random.normal(kx, (B, L_IN), jnp.float32)
    params = init_params(kp)

    prep = prepare_params(params)        # one-time weight re-layout + bf16 cast (outside jit)
    y = jax.jit(mynet_forward)(x, prep)
    y = jax.block_until_ready(y)

    y_ref = reference(x, params)
    assert y.shape == (B,)
    # tolerance loosened slightly vs f32 reference because W1/pooled go through bf16 on the MXU
    assert jnp.allclose(y, y_ref, rtol=1e-2, atol=1e-2), (y, y_ref)
    print("KERNEL_OK")
</pallas_src>

<mosaic_0001>
module attributes {stable_mosaic.version = 11 : i64} {
  func.func @_fused_kernel(%arg0: i32, %arg1: i32, %arg2: memref<6x8x213xf32, #tpu.memory_space<vmem>>, %arg3: memref<96xf32, #tpu.memory_space<smem>>, %arg4: memref<32xf32, #tpu.memory_space<smem>>, %arg5: memref<8x64x213xbf16, #tpu.memory_space<vmem>>, %arg6: memref<1x64xf32, #tpu.memory_space<vmem>>, %arg7: memref<64x32xf32, #tpu.memory_space<vmem>>, %arg8: memref<1x32xf32, #tpu.memory_space<vmem>>, %arg9: memref<1x32xf32, #tpu.memory_space<vmem>>, %arg10: memref<1xf32, #tpu.memory_space<smem>>, %arg11: memref<8x1xf32, #tpu.memory_space<vmem>>, %arg12: memref<8x64xf32, #tpu.memory_space<vmem>>) attributes {dimension_semantics = [#tpu.dimension_semantics<parallel>, #tpu.dimension_semantics<arbitrary>], iteration_bounds = array<i64: 1, 4>, scalar_prefetch = 0 : i64, scratch_operands = 1 : i64, tpu.core_type = #tpu.core_type<tc>, window_params = [{transform_indices = @transform_0, window_bounds = array<i64: 6, 8, 213>}, {transform_indices = @transform_1, window_bounds = array<i64: 96>}, {transform_indices = @transform_2, window_bounds = array<i64: 32>}, {transform_indices = @transform_3, window_bounds = array<i64: 8, 64, 213>}, {pipeline_mode = #tpu.pipeline_mode<synchronous>, transform_indices = @transform_4, window_bounds = array<i64: 1, 64>}, {pipeline_mode = #tpu.pipeline_mode<synchronous>, transform_indices = @transform_5, window_bounds = array<i64: 64, 32>}, {pipeline_mode = #tpu.pipeline_mode<synchronous>, transform_indices = @transform_6, window_bounds = array<i64: 1, 32>}, {pipeline_mode = #tpu.pipeline_mode<synchronous>, transform_indices = @transform_7, window_bounds = array<i64: 1, 32>}, {transform_indices = @transform_8, window_bounds = array<i64: 1>}, {transform_indices = @transform_9, window_bounds = array<i64: 8, 1>}]} {
    %c0_i32 = arith.constant 0 : i32
    %0 = arith.cmpi eq, %arg1, %c0_i32 : i32
    %1 = arith.extui %0 : i1 to i32
    %c0_i32_0 = arith.constant 0 : i32
    %2 = arith.cmpi ne, %1, %c0_i32_0 : i32
    scf.if %2 {
      %cst_97 = arith.constant 0.000000e+00 : f32
      %349 = vector.broadcast %cst_97 : f32 to vector<8x64xf32>
      %c0_98 = arith.constant 0 : index
      %c0_99 = arith.constant 0 : index
      %350 = vector.load %arg12[%c0_98, %c0_99] : memref<8x64xf32, #tpu.memory_space<vmem>>, vector<8x64xf32>
      tpu.vector_store %arg12[%c0_98, %c0_99], %349 {strides = array<i32>} : memref<8x64xf32, #tpu.memory_space<vmem>>, vector<8x64xf32>,
    } else {
    }
    %c0 = arith.constant 0 : index
    %c0_1 = arith.constant 0 : index
    %c0_2 = arith.constant 0 : index
    %3 = vector.load %arg2[%c0, %c0_1, %c0_2] : memref<6x8x213xf32, #tpu.memory_space<vmem>>, vector<1x8x213xf32>
    %4 = vector.shape_cast %3 : vector<1x8x213xf32> to vector<8x213xf32>
    %c1 = arith.constant 1 : index
    %c0_3 = arith.constant 0 : index
    %c0_4 = arith.constant 0 : index
    %5 = vector.load %arg2[%c1, %c0_3, %c0_4] : memref<6x8x213xf32, #tpu.memory_space<vmem>>, vector<1x8x213xf32>
    %6 = vector.shape_cast %5 : vector<1x8x213xf32> to vector<8x213xf32>
    %c2 = arith.constant 2 : index
    %c0_5 = arith.constant 0 : index
    %c0_6 = arith.constant 0 : index
    %7 = vector.load %arg2[%c2, %c0_5, %c0_6] : memref<6x8x213xf32, #tpu.memory_space<vmem>>, vector<1x8x213xf32>
    %8 = vector.shape_cast %7 : vector<1x8x213xf32> to vector<8x213xf32>
    %c3 = arith.constant 3 : index
    %c0_7 = arith.constant 0 : index
    %c0_8 = arith.constant 0 : index
    %9 = vector.load %arg2[%c3, %c0_7, %c0_8] : memref<6x8x213xf32, #tpu.memory_space<vmem>>, vector<1x8x213xf32>
    %10 = vector.shape_cast %9 : vector<1x8x213xf32> to vector<8x213xf32>
    %c4 = arith.constant 4 : index
    %c0_9 = arith.constant 0 : index
    %c0_10 = arith.constant 0 : index
    %11 = vector.load %arg2[%c4, %c0_9, %c0_10] : memref<6x8x213xf32, #tpu.memory_space<vmem>>, vector<1x8x213xf32>
    %12 = vector.shape_cast %11 : vector<1x8x213xf32> to vector<8x213xf32>
    %c5 = arith.constant 5 : index
    %c0_11 = arith.constant 0 : index
    %c0_12 = arith.constant 0 : index
    %13 = vector.load %arg2[%c5, %c0_11, %c0_12] : memref<6x8x213xf32, #tpu.memory_space<vmem>>, vector<1x8x213xf32>
    %14 = vector.shape_cast %13 : vector<1x8x213xf32> to vector<8x213xf32>
    %c8_i32 = arith.constant 8 : i32
    %15 = arith.muli %arg1, %c8_i32 : i32
    %c0_i32_13 = arith.constant 0 : i32
    %16 = arith.addi %15, %c0_i32_13 : i32
    %c3_i32 = arith.constant 3 : i32
    %17 = arith.muli %c3_i32, %16 : i32
    %c0_i32_14 = arith.constant 0 : i32
    %18 = arith.addi %17, %c0_i32_14 : i32
    %19 = arith.index_cast %18 : i32 to index
    %20 = memref.load %arg3[%19] : memref<96xf32, #tpu.memory_space<smem>>
    %c3_i32_15 = arith.constant 3 : i32
    %21 = arith.muli %c3_i32_15, %16 : i32
    %c1_i32 = arith.constant 1 : i32
    %22 = arith.addi %21, %c1_i32 : i32
    %23 = arith.index_cast %22 : i32 to index
    %24 = memref.load %arg3[%23] : memref<96xf32, #tpu.memory_space<smem>>
    %c3_i32_16 = arith.constant 3 : i32
    %25 = arith.muli %c3_i32_16, %16 : i32
    %c2_i32 = arith.constant 2 : i32
    %26 = arith.addi %25, %c2_i32 : i32
    %27 = arith.index_cast %26 : i32 to index
    %28 = memref.load %arg3[%27] : memref<96xf32, #tpu.memory_space<smem>>
    %29 = arith.index_cast %16 : i32 to index
    %30 = memref.load %arg4[%29] : memref<32xf32, #tpu.memory_space<smem>>
    %31 = vector.broadcast %20 : f32 to vector<8x213xf32>
    %32 = arith.mulf %4, %31 : vector<8x213xf32>
    %33 = vector.broadcast %24 : f32 to vector<8x213xf32>
    %34 = arith.mulf %6, %33 : vector<8x213xf32>
    %35 = arith.addf %32, %34 : vector<8x213xf32>
    %36 = vector.broadcast %28 : f32 to vector<8x213xf32>
    %37 = arith.mulf %8, %36 : vector<8x213xf32>
    %38 = arith.addf %35, %37 : vector<8x213xf32>
    %39 = vector.broadcast %30 : f32 to vector<8x213xf32>
    %40 = arith.addf %38, %39 : vector<8x213xf32>
    %41 = vector.broadcast %20 : f32 to vector<8x213xf32>
    %42 = arith.mulf %10, %41 : vector<8x213xf32>
    %43 = vector.broadcast %24 : f32 to vector<8x213xf32>
    %44 = arith.mulf %12, %43 : vector<8x213xf32>
    %45 = arith.addf %42, %44 : vector<8x213xf32>
    %46 = vector.broadcast %28 : f32 to vector<8x213xf32>
    %47 = arith.mulf %14, %46 : vector<8x213xf32>
    %48 = arith.addf %45, %47 : vector<8x213xf32>
    %49 = vector.broadcast %30 : f32 to vector<8x213xf32>
    %50 = arith.addf %48, %49 : vector<8x213xf32>
    %51 = arith.maximumf %40, %50 : vector<8x213xf32>
    %52 = arith.truncf %51 : vector<8x213xf32> to vector<8x213xbf16>
    %c0_17 = arith.constant 0 : index
    %c0_18 = arith.constant 0 : index
    %c0_19 = arith.constant 0 : index
    %53 = vector.load %arg5[%c0_17, %c0_18, %c0_19] : memref<8x64x213xbf16, #tpu.memory_space<vmem>>, vector<1x64x213xbf16>
    %54 = vector.shape_cast %53 : vector<1x64x213xbf16> to vector<64x213xbf16>
    %cst = arith.constant dense<0.000000e+00> : vector<8x64xf32>
    %55 = tpu.matmul %52, %54, %cst {dimension_numbers = #tpu.dot_dimension_numbers<[1], [1], [0], [0], [0, 0, 1, 0], [], []>} : vector<8x213xbf16>, vector<64x213xbf16>, vector<8x64xf32> -> vector<8x64xf32>
    %c1_i32_20 = arith.constant 1 : i32
    %56 = arith.addi %15, %c1_i32_20 : i32
    %c3_i32_21 = arith.constant 3 : i32
    %57 = arith.muli %c3_i32_21, %56 : i32
    %c0_i32_22 = arith.constant 0 : i32
    %58 = arith.addi %57, %c0_i32_22 : i32
    %59 = arith.index_cast %58 : i32 to index
    %60 = memref.load %arg3[%59] : memref<96xf32, #tpu.memory_space<smem>>
    %c3_i32_23 = arith.constant 3 : i32
    %61 = arith.muli %c3_i32_23, %56 : i32
    %c1_i32_24 = arith.constant 1 : i32
    %62 = arith.addi %61, %c1_i32_24 : i32
    %63 = arith.index_cast %62 : i32 to index
    %64 = memref.load %arg3[%63] : memref<96xf32, #tpu.memory_space<smem>>
    %c3_i32_25 = arith.constant 3 : i32
    %65 = arith.muli %c3_i32_25, %56 : i32
    %c2_i32_26 = arith.constant 2 : i32
    %66 = arith.addi %65, %c2_i32_26 : i32
    %67 = arith.index_cast %66 : i32 to index
    %68 = memref.load %arg3[%67] : memref<96xf32, #tpu.memory_space<smem>>
    %69 = arith.index_cast %56 : i32 to index
    %70 = memref.load %arg4[%69] : memref<32xf32, #tpu.memory_space<smem>>
    %71 = vector.broadcast %60 : f32 to vector<8x213xf32>
    %72 = arith.mulf %4, %71 : vector<8x213xf32>
    %73 = vector.broadcast %64 : f32 to vector<8x213xf32>
    %74 = arith.mulf %6, %73 : vector<8x213xf32>
    %75 = arith.addf %72, %74 : vector<8x213xf32>
    %76 = vector.broadcast %68 : f32 to vector<8x213xf32>
    %77 = arith.mulf %8, %76 : vector<8x213xf32>
    %78 = arith.addf %75, %77 : vector<8x213xf32>
    %79 = vector.broadcast %70 : f32 to vector<8x213xf32>
    %80 = arith.addf %78, %79 : vector<8x213xf32>
    %81 = vector.broadcast %60 : f32 to vector<8x213xf32>
    %82 = arith.mulf %10, %81 : vector<8x213xf32>
    %83 = vector.broadcast %64 : f32 to vector<8x213xf32>
    %84 = arith.mulf %12, %83 : vector<8x213xf32>
    %85 = arith.addf %82, %84 : vector<8x213xf32>
    %86 = vector.broadcast %68 : f32 to vector<8x213xf32>
    %87 = arith.mulf %14, %86 : vector<8x213xf32>
    %88 = arith.addf %85, %87 : vector<8x213xf32>
    %89 = vector.broadcast %70 : f32 to vector<8x213xf32>
    %90 = arith.addf %88, %89 : vector<8x213xf32>
    %91 = arith.maximumf %80, %90 : vector<8x213xf32>
    %92 = arith.truncf %91 : vector<8x213xf32> to vector<8x213xbf16>
    %c1_27 = arith.constant 1 : index
    %c0_28 = arith.constant 0 : index
    %c0_29 = arith.constant 0 : index
    %93 = vector.load %arg5[%c1_27, %c0_28, %c0_29] : memref<8x64x213xbf16, #tpu.memory_space<vmem>>, vector<1x64x213xbf16>
    %94 = vector.shape_cast %93 : vector<1x64x213xbf16> to vector<64x213xbf16>
    %cst_30 = arith.constant dense<0.000000e+00> : vector<8x64xf32>
    %95 = tpu.matmul %92, %94, %cst_30 {dimension_numbers = #tpu.dot_dimension_numbers<[1], [1], [0], [0], [0, 0, 1, 0], [], []>} : vector<8x213xbf16>, vector<64x213xbf16>, vector<8x64xf32> -> vector<8x64xf32>
    %96 = arith.addf %55, %95 : vector<8x64xf32>
    %c2_i32_31 = arith.constant 2 : i32
    %97 = arith.addi %15, %c2_i32_31 : i32
    %c3_i32_32 = arith.constant 3 : i32
    %98 = arith.muli %c3_i32_32, %97 : i32
    %c0_i32_33 = arith.constant 0 : i32
    %99 = arith.addi %98, %c0_i32_33 : i32
    %100 = arith.index_cast %99 : i32 to index
    %101 = memref.load %arg3[%100] : memref<96xf32, #tpu.memory_space<smem>>
    %c3_i32_34 = arith.constant 3 : i32
    %102 = arith.muli %c3_i32_34, %97 : i32
    %c1_i32_35 = arith.constant 1 : i32
    %103 = arith.addi %102, %c1_i32_35 : i32
    %104 = arith.index_cast %103 : i32 to index
    %105 = memref.load %arg3[%104] : memref<96xf32, #tpu.memory_space<smem>>
    %c3_i32_36 = arith.constant 3 : i32
    %106 = arith.muli %c3_i32_36, %97 : i32
    %c2_i32_37 = arith.constant 2 : i32
    %107 = arith.addi %106, %c2_i32_37 : i32
    %108 = arith.index_cast %107 : i32 to index
    %109 = memref.load %arg3[%108] : memref<96xf32, #tpu.memory_space<smem>>
    %110 = arith.index_cast %97 : i32 to index
    %111 = memref.load %arg4[%110] : memref<32xf32, #tpu.memory_space<smem>>
    %112 = vector.broadcast %101 : f32 to vector<8x213xf32>
    %113 = arith.mulf %4, %112 : vector<8x213xf32>
    %114 = vector.broadcast %105 : f32 to vector<8x213xf32>
    %115 = arith.mulf %6, %114 : vector<8x213xf32>
    %116 = arith.addf %113, %115 : vector<8x213xf32>
    %117 = vector.broadcast %109 : f32 to vector<8x213xf32>
    %118 = arith.mulf %8, %117 : vector<8x213xf32>
    %119 = arith.addf %116, %118 : vector<8x213xf32>
    %120 = vector.broadcast %111 : f32 to vector<8x213xf32>
    %121 = arith.addf %119, %120 : vector<8x213xf32>
    %122 = vector.broadcast %101 : f32 to vector<8x213xf32>
    %123 = arith.mulf %10, %122 : vector<8x213xf32>
    %124 = vector.broadcast %105 : f32 to vector<8x213xf32>
    %125 = arith.mulf %12, %124 : vector<8x213xf32>
    %126 = arith.addf %123, %125 : vector<8x213xf32>
    %127 = vector.broadcast %109 : f32 to vector<8x213xf32>
    %128 = arith.mulf %14, %127 : vector<8x213xf32>
    %129 = arith.addf %126, %128 : vector<8x213xf32>
    %130 = vector.broadcast %111 : f32 to vector<8x213xf32>
    %131 = arith.addf %129, %130 : vector<8x213xf32>
    %132 = arith.maximumf %121, %131 : vector<8x213xf32>
    %133 = arith.truncf %132 : vector<8x213xf32> to vector<8x213xbf16>
    %c2_38 = arith.constant 2 : index
    %c0_39 = arith.constant 0 : index
    %c0_40 = arith.constant 0 : index
    %134 = vector.load %arg5[%c2_38, %c0_39, %c0_40] : memref<8x64x213xbf16, #tpu.memory_space<vmem>>, vector<1x64x213xbf16>
    %135 = vector.shape_cast %134 : vector<1x64x213xbf16> to vector<64x213xbf16>
    %cst_41 = arith.constant dense<0.000000e+00> : vector<8x64xf32>
    %136 = tpu.matmul %133, %135, %cst_41 {dimension_numbers = #tpu.dot_dimension_numbers<[1], [1], [0], [0], [0, 0, 1, 0], [], []>} : vector<8x213xbf16>, vector<64x213xbf16>, vector<8x64xf32> -> vector<8x64xf32>
    %137 = arith.addf %96, %136 : vector<8x64xf32>
    %c3_i32_42 = arith.constant 3 : i32
    %138 = arith.addi %15, %c3_i32_42 : i32
    %c3_i32_43 = arith.constant 3 : i32
    %139 = arith.muli %c3_i32_43, %138 : i32
    %c0_i32_44 = arith.constant 0 : i32
    %140 = arith.addi %139, %c0_i32_44 : i32
    %141 = arith.index_cast %140 : i32 to index
    %142 = memref.load %arg3[%141] : memref<96xf32, #tpu.memory_space<smem>>
    %c3_i32_45 = arith.constant 3 : i32
    %143 = arith.muli %c3_i32_45, %138 : i32
    %c1_i32_46 = arith.constant 1 : i32
    %144 = arith.addi %143, %c1_i32_46 : i32
    %145 = arith.index_cast %144 : i32 to index
    %146 = memref.load %arg3[%145] : memref<96xf32, #tpu.memory_space<smem>>
    %c3_i32_47 = arith.constant 3 : i32
    %147 = arith.muli %c3_i32_47, %138 : i32
    %c2_i32_48 = arith.constant 2 : i32
    %148 = arith.addi %147, %c2_i32_48 : i32
    %149 = arith.index_cast %148 : i32 to index
    %150 = memref.load %arg3[%149] : memref<96xf32, #tpu.memory_space<smem>>
    %151 = arith.index_cast %138 : i32 to index
    %152 = memref.load %arg4[%151] : memref<32xf32, #tpu.memory_space<smem>>
    %153 = vector.broadcast %142 : f32 to vector<8x213xf32>
    %154 = arith.mulf %4, %153 : vector<8x213xf32>
    %155 = vector.broadcast %146 : f32 to vector<8x213xf32>
    %156 = arith.mulf %6, %155 : vector<8x213xf32>
    %157 = arith.addf %154, %156 : vector<8x213xf32>
    %158 = vector.broadcast %150 : f32 to vector<8x213xf32>
    %159 = arith.mulf %8, %158 : vector<8x213xf32>
    %160 = arith.addf %157, %159 : vector<8x213xf32>
    %161 = vector.broadcast %152 : f32 to vector<8x213xf32>
    %162 = arith.addf %160, %161 : vector<8x213xf32>
    %163 = vector.broadcast %142 : f32 to vector<8x213xf32>
    %164 = arith.mulf %10, %163 : vector<8x213xf32>
    %165 = vector.broadcast %146 : f32 to vector<8x213xf32>
    %166 = arith.mulf %12, %165 : vector<8x213xf32>
    %167 = arith.addf %164, %166 : vector<8x213xf32>
    %168 = vector.broadcast %150 : f32 to vector<8x213xf32>
    %169 = arith.mulf %14, %168 : vector<8x213xf32>
    %170 = arith.addf %167, %169 : vector<8x213xf32>
    %171 = vector.broadcast %152 : f32 to vector<8x213xf32>
    %172 = arith.addf %170, %171 : vector<8x213xf32>
    %173 = arith.maximumf %162, %172 : vector<8x213xf32>
    %174 = arith.truncf %173 : vector<8x213xf32> to vector<8x213xbf16>
    %c3_49 = arith.constant 3 : index
    %c0_50 = arith.constant 0 : index
    %c0_51 = arith.constant 0 : index
    %175 = vector.load %arg5[%c3_49, %c0_50, %c0_51] : memref<8x64x213xbf16, #tpu.memory_space<vmem>>, vector<1x64x213xbf16>
    %176 = vector.shape_cast %175 : vector<1x64x213xbf16> to vector<64x213xbf16>
    %cst_52 = arith.constant dense<0.000000e+00> : vector<8x64xf32>
    %177 = tpu.matmul %174, %176, %cst_52 {dimension_numbers = #tpu.dot_dimension_numbers<[1], [1], [0], [0], [0, 0, 1, 0], [], []>} : vector<8x213xbf16>, vector<64x213xbf16>, vector<8x64xf32> -> vector<8x64xf32>
    %178 = arith.addf %137, %177 : vector<8x64xf32>
    %c4_i32 = arith.constant 4 : i32
    %179 = arith.addi %15, %c4_i32 : i32
    %c3_i32_53 = arith.constant 3 : i32
    %180 = arith.muli %c3_i32_53, %179 : i32
    %c0_i32_54 = arith.constant 0 : i32
    %181 = arith.addi %180, %c0_i32_54 : i32
    %182 = arith.index_cast %181 : i32 to index
    %183 = memref.load %arg3[%182] : memref<96xf32, #tpu.memory_space<smem>>
    %c3_i32_55 = arith.constant 3 : i32
    %184 = arith.muli %c3_i32_55, %179 : i32
    %c1_i32_56 = arith.constant 1 : i32
    %185 = arith.addi %184, %c1_i32_56 : i32
    %186 = arith.index_cast %185 : i32 to index
    %187 = memref.load %arg3[%186] : memref<96xf32, #tpu.memory_space<smem>>
    %c3_i32_57 = arith.constant 3 : i32
    %188 = arith.muli %c3_i32_57, %179 : i32
    %c2_i32_58 = arith.constant 2 : i32
    %189 = arith.addi %188, %c2_i32_58 : i32
    %190 = arith.index_cast %189 : i32 to index
    %191 = memref.load %arg3[%190] : memref<96xf32, #tpu.memory_space<smem>>
    %192 = arith.index_cast %179 : i32 to index
    %193 = memref.load %arg4[%192] : memref<32xf32, #tpu.memory_space<smem>>
    %194 = vector.broadcast %183 : f32 to vector<8x213xf32>
    %195 = arith.mulf %4, %194 : vector<8x213xf32>
    %196 = vector.broadcast %187 : f32 to vector<8x213xf32>
    %197 = arith.mulf %6, %196 : vector<8x213xf32>
    %198 = arith.addf %195, %197 : vector<8x213xf32>
    %199 = vector.broadcast %191 : f32 to vector<8x213xf32>
    %200 = arith.mulf %8, %199 : vector<8x213xf32>
    %201 = arith.addf %198, %200 : vector<8x213xf32>
    %202 = vector.broadcast %193 : f32 to vector<8x213xf32>
    %203 = arith.addf %201, %202 : vector<8x213xf32>
    %204 = vector.broadcast %183 : f32 to vector<8x213xf32>
    %205 = arith.mulf %10, %204 : vector<8x213xf32>
    %206 = vector.broadcast %187 : f32 to vector<8x213xf32>
    %207 = arith.mulf %12, %206 : vector<8x213xf32>
    %208 = arith.addf %205, %207 : vector<8x213xf32>
    %209 = vector.broadcast %191 : f32 to vector<8x213xf32>
    %210 = arith.mulf %14, %209 : vector<8x213xf32>
    %211 = arith.addf %208, %210 : vector<8x213xf32>
    %212 = vector.broadcast %193 : f32 to vector<8x213xf32>
    %213 = arith.addf %211, %212 : vector<8x213xf32>
    %214 = arith.maximumf %203, %213 : vector<8x213xf32>
    %215 = arith.truncf %214 : vector<8x213xf32> to vector<8x213xbf16>
    %c4_59 = arith.constant 4 : index
    %c0_60 = arith.constant 0 : index
    %c0_61 = arith.constant 0 : index
    %216 = vector.load %arg5[%c4_59, %c0_60, %c0_61] : memref<8x64x213xbf16, #tpu.memory_space<vmem>>, vector<1x64x213xbf16>
    %217 = vector.shape_cast %216 : vector<1x64x213xbf16> to vector<64x213xbf16>
    %cst_62 = arith.constant dense<0.000000e+00> : vector<8x64xf32>
    %218 = tpu.matmul %215, %217, %cst_62 {dimension_numbers = #tpu.dot_dimension_numbers<[1], [1], [0], [0], [0, 0, 1, 0], [], []>} : vector<8x213xbf16>, vector<64x213xbf16>, vector<8x64xf32> -> vector<8x64xf32>
    %219 = arith.addf %178, %218 : vector<8x64xf32>
    %c5_i32 = arith.constant 5 : i32
    %220 = arith.addi %15, %c5_i32 : i32
    %c3_i32_63 = arith.constant 3 : i32
    %221 = arith.muli %c3_i32_63, %220 : i32
    %c0_i32_64 = arith.constant 0 : i32
    %222 = arith.addi %221, %c0_i32_64 : i32
    %223 = arith.index_cast %222 : i32 to index
    %224 = memref.load %arg3[%223] : memref<96xf32, #tpu.memory_space<smem>>
    %c3_i32_65 = arith.constant 3 : i32
    %225 = arith.muli %c3_i32_65, %220 : i32
    %c1_i32_66 = arith.constant 1 : i32
    %226 = arith.addi %225, %c1_i32_66 : i32
    %227 = arith.index_cast %226 : i32 to index
    %228 = memref.load %arg3[%227] : memref<96xf32, #tpu.memory_space<smem>>
    %c3_i32_67 = arith.constant 3 : i32
    %229 = arith.muli %c3_i32_67, %220 : i32
    %c2_i32_68 = arith.constant 2 : i32
    %230 = arith.addi %229, %c2_i32_68 : i32
    %231 = arith.index_cast %230 : i32 to index
    %232 = memref.load %arg3[%231] : memref<96xf32, #tpu.memory_space<smem>>
    %233 = arith.index_cast %220 : i32 to index
    %234 = memref.load %arg4[%233] : memref<32xf32, #tpu.memory_space<smem>>
    %235 = vector.broadcast %224 : f32 to vector<8x213xf32>
    %236 = arith.mulf %4, %235 : vector<8x213xf32>
    %237 = vector.broadcast %228 : f32 to vector<8x213xf32>
    %238 = arith.mulf %6, %237 : vector<8x213xf32>
    %239 = arith.addf %236, %238 : vector<8x213xf32>
    %240 = vector.broadcast %232 : f32 to vector<8x213xf32>
    %241 = arith.mulf %8, %240 : vector<8x213xf32>
    %242 = arith.addf %239, %241 : vector<8x213xf32>
    %243 = vector.broadcast %234 : f32 to vector<8x213xf32>
    %244 = arith.addf %242, %243 : vector<8x213xf32>
    %245 = vector.broadcast %224 : f32 to vector<8x213xf32>
    %246 = arith.mulf %10, %245 : vector<8x213xf32>
    %247 = vector.broadcast %228 : f32 to vector<8x213xf32>
    %248 = arith.mulf %12, %247 : vector<8x213xf32>
    %249 = arith.addf %246, %248 : vector<8x213xf32>
    %250 = vector.broadcast %232 : f32 to vector<8x213xf32>
    %251 = arith.mulf %14, %250 : vector<8x213xf32>
    %252 = arith.addf %249, %251 : vector<8x213xf32>
    %253 = vector.broadcast %234 : f32 to vector<8x213xf32>
    %254 = arith.addf %252, %253 : vector<8x213xf32>
    %255 = arith.maximumf %244, %254 : vector<8x213xf32>
    %256 = arith.truncf %255 : vector<8x213xf32> to vector<8x213xbf16>
    %c5_69 = arith.constant 5 : index
    %c0_70 = arith.constant 0 : index
    %c0_71 = arith.constant 0 : index
    %257 = vector.load %arg5[%c5_69, %c0_70, %c0_71] : memref<8x64x213xbf16, #tpu.memory_space<vmem>>, vector<1x64x213xbf16>
    %258 = vector.shape_cast %257 : vector<1x64x213xbf16> to vector<64x213xbf16>
    %cst_72 = arith.constant dense<0.000000e+00> : vector<8x64xf32>
    %259 = tpu.matmul %256, %258, %cst_72 {dimension_numbers = #tpu.dot_dimension_numbers<[1], [1], [0], [0], [0, 0, 1, 0], [], []>} : vector<8x213xbf16>, vector<64x213xbf16>, vector<8x64xf32> -> vector<8x64xf32>
    %260 = arith.addf %219, %259 : vector<8x64xf32>
    %c6_i32 = arith.constant 6 : i32
    %261 = arith.addi %15, %c6_i32 : i32
    %c3_i32_73 = arith.constant 3 : i32
    %262 = arith.muli %c3_i32_73, %261 : i32
    %c0_i32_74 = arith.constant 0 : i32
    %263 = arith.addi %262, %c0_i32_74 : i32
    %264 = arith.index_cast %263 : i32 to index
    %265 = memref.load %arg3[%264] : memref<96xf32, #tpu.memory_space<smem>>
    %c3_i32_75 = arith.constant 3 : i32
    %266 = arith.muli %c3_i32_75, %261 : i32
    %c1_i32_76 = arith.constant 1 : i32
    %267 = arith.addi %266, %c1_i32_76 : i32
    %268 = arith.index_cast %267 : i32 to index
    %269 = memref.load %arg3[%268] : memref<96xf32, #tpu.memory_space<smem>>
    %c3_i32_77 = arith.constant 3 : i32
    %270 = arith.muli %c3_i32_77, %261 : i32
    %c2_i32_78 = arith.constant 2 : i32
    %271 = arith.addi %270, %c2_i32_78 : i32
    %272 = arith.index_cast %271 : i32 to index
    %273 = memref.load %arg3[%272] : memref<96xf32, #tpu.memory_space<smem>>
    %274 = arith.index_cast %261 : i32 to index
    %275 = memref.load %arg4[%274] : memref<32xf32, #tpu.memory_space<smem>>
    %276 = vector.broadcast %265 : f32 to vector<8x213xf32>
    %277 = arith.mulf %4, %276 : vector<8x213xf32>
    %278 = vector.broadcast %269 : f32 to vector<8x213xf32>
    %279 = arith.mulf %6, %278 : vector<8x213xf32>
    %280 = arith.addf %277, %279 : vector<8x213xf32>
    %281 = vector.broadcast %273 : f32 to vector<8x213xf32>
    %282 = arith.mulf %8, %281 : vector<8x213xf32>
    %283 = arith.addf %280, %282 : vector<8x213xf32>
    %284 = vector.broadcast %275 : f32 to vector<8x213xf32>
    %285 = arith.addf %283, %284 : vector<8x213xf32>
    %286 = vector.broadcast %265 : f32 to vector<8x213xf32>
    %287 = arith.mulf %10, %286 : vector<8x213xf32>
    %288 = vector.broadcast %269 : f32 to vector<8x213xf32>
    %289 = arith.mulf %12, %288 : vector<8x213xf32>
    %290 = arith.addf %287, %289 : vector<8x213xf32>
    %291 = vector.broadcast %273 : f32 to vector<8x213xf32>
    %292 = arith.mulf %14, %291 : vector<8x213xf32>
    %293 = arith.addf %290, %292 : vector<8x213xf32>
    %294 = vector.broadcast %275 : f32 to vector<8x213xf32>
    %295 = arith.addf %293, %294 : vector<8x213xf32>
    %296 = arith.maximumf %285, %295 : vector<8x213xf32>
    %297 = arith.truncf %296 : vector<8x213xf32> to vector<8x213xbf16>
    %c6 = arith.constant 6 : index
    %c0_79 = arith.constant 0 : index
    %c0_80 = arith.constant 0 : index
    %298 = vector.load %arg5[%c6, %c0_79, %c0_80] : memref<8x64x213xbf16, #tpu.memory_space<vmem>>, vector<1x64x213xbf16>
    %299 = vector.shape_cast %298 : vector<1x64x213xbf16> to vector<64x213xbf16>
    %cst_81 = arith.constant dense<0.000000e+00> : vector<8x64xf32>
    %300 = tpu.matmul %297, %299, %cst_81 {dimension_numbers = #tpu.dot_dimension_numbers<[1], [1], [0], [0], [0, 0, 1, 0], [], []>} : vector<8x213xbf16>, vector<64x213xbf16>, vector<8x64xf32> -> vector<8x64xf32>
    %301 = arith.addf %260, %300 : vector<8x64xf32>
    %c7_i32 = arith.constant 7 : i32
    %302 = arith.addi %15, %c7_i32 : i32
    %c3_i32_82 = arith.constant 3 : i32
    %303 = arith.muli %c3_i32_82, %302 : i32
    %c0_i32_83 = arith.constant 0 : i32
    %304 = arith.addi %303, %c0_i32_83 : i32
    %305 = arith.index_cast %304 : i32 to index
    %306 = memref.load %arg3[%305] : memref<96xf32, #tpu.memory_space<smem>>
    %c3_i32_84 = arith.constant 3 : i32
    %307 = arith.muli %c3_i32_84, %302 : i32
    %c1_i32_85 = arith.constant 1 : i32
    %308 = arith.addi %307, %c1_i32_85 : i32
    %309 = arith.index_cast %308 : i32 to index
    %310 = memref.load %arg3[%309] : memref<96xf32, #tpu.memory_space<smem>>
    %c3_i32_86 = arith.constant 3 : i32
    %311 = arith.muli %c3_i32_86, %302 : i32
    %c2_i32_87 = arith.constant 2 : i32
    %312 = arith.addi %311, %c2_i32_87 : i32
    %313 = arith.index_cast %312 : i32 to index
    %314 = memref.load %arg3[%313] : memref<96xf32, #tpu.memory_space<smem>>
    %315 = arith.index_cast %302 : i32 to index
    %316 = memref.load %arg4[%315] : memref<32xf32, #tpu.memory_space<smem>>
    %317 = vector.broadcast %306 : f32 to vector<8x213xf32>
    %318 = arith.mulf %4, %317 : vector<8x213xf32>
    %319 = vector.broadcast %310 : f32 to vector<8x213xf32>
    %320 = arith.mulf %6, %319 : vector<8x213xf32>
    %321 = arith.addf %318, %320 : vector<8x213xf32>
    %322 = vector.broadcast %314 : f32 to vector<8x213xf32>
    %323 = arith.mulf %8, %322 : vector<8x213xf32>
    %324 = arith.addf %321, %323 : vector<8x213xf32>
    %325 = vector.broadcast %316 : f32 to vector<8x213xf32>
    %326 = arith.addf %324, %325 : vector<8x213xf32>
    %327 = vector.broadcast %306 : f32 to vector<8x213xf32>
    %328 = arith.mulf %10, %327 : vector<8x213xf32>
    %329 = vector.broadcast %310 : f32 to vector<8x213xf32>
    %330 = arith.mulf %12, %329 : vector<8x213xf32>
    %331 = arith.addf %328, %330 : vector<8x213xf32>
    %332 = vector.broadcast %314 : f32 to vector<8x213xf32>
    %333 = arith.mulf %14, %332 : vector<8x213xf32>
    %334 = arith.addf %331, %333 : vector<8x213xf32>
    %335 = vector.broadcast %316 : f32 to vector<8x213xf32>
    %336 = arith.addf %334, %335 : vector<8x213xf32>
    %337 = arith.maximumf %326, %336 : vector<8x213xf32>
    %338 = arith.truncf %337 : vector<8x213xf32> to vector<8x213xbf16>
    %c7 = arith.constant 7 : index
    %c0_88 = arith.constant 0 : index
    %c0_89 = arith.constant 0 : index
    %339 = vector.load %arg5[%c7, %c0_88, %c0_89] : memref<8x64x213xbf16, #tpu.memory_space<vmem>>, vector<1x64x213xbf16>
    %340 = vector.shape_cast %339 : vector<1x64x213xbf16> to vector<64x213xbf16>
    %cst_90 = arith.constant dense<0.000000e+00> : vector<8x64xf32>
    %341 = tpu.matmul %338, %340, %cst_90 {dimension_numbers = #tpu.dot_dimension_numbers<[1], [1], [0], [0], [0, 0, 1, 0], [], []>} : vector<8x213xbf16>, vector<64x213xbf16>, vector<8x64xf32> -> vector<8x64xf32>
    %342 = arith.addf %301, %341 : vector<8x64xf32>
    %c0_91 = arith.constant 0 : index
    %c0_92 = arith.constant 0 : index
    %343 = vector.load %arg12[%c0_91, %c0_92] : memref<8x64xf32, #tpu.memory_space<vmem>>, vector<8x64xf32>
    %344 = arith.addf %343, %342 : vector<8x64xf32>
    %c0_93 = arith.constant 0 : index
    %c0_94 = arith.constant 0 : index
    %345 = vector.load %arg12[%c0_93, %c0_94] : memref<8x64xf32, #tpu.memory_space<vmem>>, vector<8x64xf32>
    tpu.vector_store %arg12[%c0_93, %c0_94], %344 {strides = array<i32>} : memref<8x64xf32, #tpu.memory_space<vmem>>, vector<8x64xf32>,
    %c3_i32_95 = arith.constant 3 : i32
    %346 = arith.cmpi eq, %arg1, %c3_i32_95 : i32
    %347 = arith.extui %346 : i1 to i32
    %c0_i32_96 = arith.constant 0 : i32
    %348 = arith.cmpi ne, %347, %c0_i32_96 : i32
    scf.if %348 {
      %c0_97 = arith.constant 0 : index
      %c0_98 = arith.constant 0 : index
      %349 = vector.load %arg12[%c0_97, %c0_98] : memref<8x64xf32, #tpu.memory_space<vmem>>, vector<8x64xf32>
      %c0_99 = arith.constant 0 : index
      %c0_100 = arith.constant 0 : index
      %350 = vector.load %arg6[%c0_99, %c0_100] : memref<1x64xf32, #tpu.memory_space<vmem>>, vector<1x64xf32>
      %351 = vector.broadcast %350 : vector<1x64xf32> to vector<8x64xf32>
      %352 = arith.addf %349, %351 : vector<8x64xf32>
      %cst_101 = arith.constant 0.000000e+00 : f32
      %353 = vector.broadcast %cst_101 : f32 to vector<8x64xf32>
      %354 = arith.maximumf %352, %353 : vector<8x64xf32>
      %c0_102 = arith.constant 0 : index
      %c0_103 = arith.constant 0 : index
      %355 = vector.load %arg7[%c0_102, %c0_103] : memref<64x32xf32, #tpu.memory_space<vmem>>, vector<64x32xf32>
      %cst_104 = arith.constant dense<0.000000e+00> : vector<8x32xf32>
      %356 = tpu.matmul %354, %355, %cst_104 {dimension_numbers = #tpu.dot_dimension_numbers<[1], [0], [0], [1], [0, 0, 1, 1], [], []>} : vector<8x64xf32>, vector<64x32xf32>, vector<8x32xf32> -> vector<8x32xf32>
      %c0_105 = arith.constant 0 : index
      %c0_106 = arith.constant 0 : index
      %357 = vector.load %arg8[%c0_105, %c0_106] : memref<1x32xf32, #tpu.memory_space<vmem>>, vector<1x32xf32>
      %358 = vector.broadcast %357 : vector<1x32xf32> to vector<8x32xf32>
      %359 = arith.addf %356, %358 : vector<8x32xf32>
      %cst_107 = arith.constant 0.000000e+00 : f32
      %360 = vector.broadcast %cst_107 : f32 to vector<8x32xf32>
      %361 = arith.maximumf %359, %360 : vector<8x32xf32>
      %362 = math.absf %359 : vector<8x32xf32>
      %cst_108 = arith.constant 0.000000e+00 : f32
      %363 = vector.broadcast %cst_108 : f32 to vector<8x32xf32>
      %364 = arith.subf %363, %362 : vector<8x32xf32>
      %365 = math.exp %364 : vector<8x32xf32>
      %cst_109 = arith.constant 1.000000e+00 : f32
      %366 = vector.broadcast %cst_109 : f32 to vector<8x32xf32>
      %367 = arith.addf %366, %365 : vector<8x32xf32>
      %368 = math.log %367 : vector<8x32xf32>
      %369 = arith.addf %361, %368 : vector<8x32xf32>
      %c0_110 = arith.constant 0 : index
      %c0_111 = arith.constant 0 : index
      %370 = vector.load %arg9[%c0_110, %c0_111] : memref<1x32xf32, #tpu.memory_space<vmem>>, vector<1x32xf32>
      %371 = vector.broadcast %370 : vector<1x32xf32> to vector<8x32xf32>
      %372 = arith.mulf %369, %371 : vector<8x32xf32>
      %cst_112 = arith.constant dense<0.000000e+00> : vector<8xf32>
      %373 = vector.multi_reduction <add>, %372, %cst_112 [1] : vector<8x32xf32> to vector<8xf32>
      %374 = vector.shape_cast %373 : vector<8xf32> to vector<8x1xf32>
      %c0_113 = arith.constant 0 : index
      %375 = memref.load %arg10[%c0_113] : memref<1xf32, #tpu.memory_space<smem>>
      %376 = vector.broadcast %375 : f32 to vector<8x1xf32>
      %377 = arith.addf %374, %376 : vector<8x1xf32>
      %c0_114 = arith.constant 0 : index
      %c0_115 = arith.constant 0 : index
      %378 = vector.load %arg11[%c0_114, %c0_115] : memref<8x1xf32, #tpu.memory_space<vmem>>, vector<8x1xf32>
      tpu.vector_store %arg11[%c0_114, %c0_115], %377 {strides = array<i32>} : memref<8x1xf32, #tpu.memory_space<vmem>>, vector<8x1xf32>,
    } else {
    }
    return
  }
  func.func @transform_0(%arg0: i32, %arg1: i32) -> (i32, i32, i32) {
    %c0_i32 = arith.constant 0 : i32
    %c0_i32_0 = arith.constant 0 : i32
    %c0_i32_1 = arith.constant 0 : i32
    return %c0_i32, %arg0, %c0_i32_0 : i32, i32, i32
  }
  func.func @transform_1(%arg0: i32, %arg1: i32) -> i32 {
    %c0_i32 = arith.constant 0 : i32
    %c0_i32_0 = arith.constant 0 : i32
    return %c0_i32 : i32
  }
  func.func @transform_2(%arg0: i32, %arg1: i32) -> i32 {
    %c0_i32 = arith.constant 0 : i32
    %c0_i32_0 = arith.constant 0 : i32
    return %c0_i32 : i32
  }
  func.func @transform_3(%arg0: i32, %arg1: i32) -> (i32, i32, i32) {
    %c0_i32 = arith.constant 0 : i32
    %c0_i32_0 = arith.constant 0 : i32
    %c0_i32_1 = arith.constant 0 : i32
    return %arg1, %c0_i32, %c0_i32_0 : i32, i32, i32
  }
  func.func @transform_4(%arg0: i32, %arg1: i32) -> (i32, i32) {
    %c0_i32 = arith.constant 0 : i32
    %c0_i32_0 = arith.constant 0 : i32
    %c0_i32_1 = arith.constant 0 : i32
    return %c0_i32, %c0_i32_0 : i32, i32
  }
  func.func @transform_5(%arg0: i32, %arg1: i32) -> (i32, i32) {
    %c0_i32 = arith.constant 0 : i32
    %c0_i32_0 = arith.constant 0 : i32
    %c0_i32_1 = arith.constant 0 : i32
    return %c0_i32, %c0_i32_0 : i32, i32
  }
  func.func @transform_6(%arg0: i32, %arg1: i32) -> (i32, i32) {
    %c0_i32 = arith.constant 0 : i32
    %c0_i32_0 = arith.constant 0 : i32
    %c0_i32_1 = arith.constant 0 : i32
    return %c0_i32, %c0_i32_0 : i32, i32
  }
  func.func @transform_7(%arg0: i32, %arg1: i32) -> (i32, i32) {
    %c0_i32 = arith.constant 0 : i32
    %c0_i32_0 = arith.constant 0 : i32
    %c0_i32_1 = arith.constant 0 : i32
    return %c0_i32, %c0_i32_0 : i32, i32
  }
  func.func @transform_8(%arg0: i32, %arg1: i32) -> i32 {
    %c0_i32 = arith.constant 0 : i32
    %c0_i32_0 = arith.constant 0 : i32
    return %c0_i32 : i32
  }
  func.func @transform_9(%arg0: i32, %arg1: i32) -> (i32, i32) {
    %c0_i32 = arith.constant 0 : i32
    %c0_i32_0 = arith.constant 0 : i32
    return %arg0, %c0_i32 : i32, i32
  }
}

</mosaic_0001>

<llo_original>
// kernel: mynet_forward.1
$region0: #{mynet_forward.1}
  #allocation0 [shape = 'u32[]', space=smem, size = 0x4, offset = 0x4, fixed_abs, tag = 'smem constant byte address 0x4 - core index']
  #allocation1 [shape = 'u32[144,128]{1,0:T(1,128)}', space=vmem, size = 0x12000, scoped, tag = 'internal scratch']
  #allocation2 [shape = 'f32[8,64]{1,0:T(8,128)}', space=vmem, size = 0x1000, scoped, tag = 'scratch operand']
  #allocation3 [shape = 'f32[1]{0:T(128)S(6)}', space=smem, size = 0x200, scoped, tag = 'scoped memory for mynet_forward.1']
  %s0 = inlined_call_operand.vmem [shape: f32[6,8,213], index: 0, kind: input, shape index: {}]
  %s1 = inlined_call_operand.vmem [shape: f32[96], index: 1, kind: input, shape index: {}]
  %s2 = inlined_call_operand.vmem [shape: f32[32], index: 2, kind: input, shape index: {}]
  %s3 = inlined_call_operand.vmem [shape: bf16[32,64,213], index: 3, kind: input, shape index: {}]
  %s4 = inlined_call_operand.vmem [shape: f32[1,64], index: 4, kind: input, shape index: {}]
  %s5 = inlined_call_operand.vmem [shape: f32[64,32], index: 5, kind: input, shape index: {}]
  %s6 = inlined_call_operand.vmem [shape: f32[1,32], index: 6, kind: input, shape index: {}]
  %s7 = inlined_call_operand.vmem [shape: f32[1,32], index: 7, kind: input, shape index: {}]
  %s8 = inlined_call_operand.<no memory space> [shape: f32[1], index: 8, kind: input, shape index: {}]
  %s9 = inlined_call_operand.vmem [shape: f32[8,1], index: 9, kind: output, shape index: {}]
  %s10 = sld [smem:[#allocation0]]
  $region85: #{mynet_forward.1} parent=0
    _
  %s12 = ssub.s32 1, %s10
  %s13 = scalar_select 0, %s12, %s10
  %14 = sst [smem:[#allocation3]] %s8
  $region1: #{mynet_forward.1} parent=0
    #allocation4 [shape = 'u8[512]{0}', space=smem, size = 0x200, scoped, tag = 'input window, operand 1, single buffered']
    #allocation5 [shape = 's32[2]{0}', space=sflag, size = 0x8, scoped, tag = 'scoped memory for mynet_forward.1']
    #allocation6 [shape = 'u8[512]{0}', space=smem, size = 0x200, scoped, tag = 'input window, operand 2, single buffered']
    #allocation7 [shape = 's32[1]{0}', space=sflag, size = 0x4, scoped, tag = 'scoped memory for mynet_forward.1']
    %15 = vsyncpa [#allocation5], 0
    %16 = vsyncpa [#allocation7], 0
    loop: start=0, step=1, limit=6
    $region2: #{mynet_forward.1} parent=1 // loop_pre_header
      _
    $region3: #{mynet_forward.1} parent=1 // loop_header
      %s18 = sphi 0, %s22
      %p19 = scmp.ge.s32.totalorder %s18, 6
      %s25 = sphi 0, %s37
      %s26 = sphi 0, %s33
      %s27 = sphi 0, %s25
      %s28 = sphi 0, %s26
      %s29 = sphi 0, %s27
      %s30 = sphi 0, %s28
      %s40 = sphi 0, %s42
      %s43 = sphi 0, %s40
      %s44 = sphi 0, %s43
      %s60 = sphi 0, %s44
      %s64 = sphi 0, %s64
      %s66 = sphi 0, %s64
      %s67 = sphi 0, %s66
      %s81 = sphi 0, %s67
      %s85 = sphi 0, %s85
      %s87 = sphi 0, %s85
      %s88 = sphi 0, %s87
      %s102 = sphi 0, %s88
      %s108 = sphi 0, %s110
      %s111 = sphi 0, %s108
      %s112 = sphi 0, %s111
      %s128 = sphi 0, %s112
      %s132 = sphi 0, %s132
      %s134 = sphi 0, %s132
      %s135 = sphi 0, %s134
      %s149 = sphi 0, %s135
      %s153 = sphi 0, %s153
      %s155 = sphi 0, %s153
      %s156 = sphi 0, %s155
      %s170 = sphi 0, %s156
      %s174 = sphi 0, %s174
      %s176 = sphi 0, %s174
      %s177 = sphi 0, %s176
      %s191 = sphi 0, %s177
      %s195 = sphi 0, %s195
      %s197 = sphi 0, %s195
      %s198 = sphi 0, %s197
      %s212 = sphi 0, %s198
      %s216 = sphi 0, %s216
      %s218 = sphi 0, %s216
      %s219 = sphi 0, %s218
      %s233 = sphi 0, %s219
      %s239 = sphi 0, %s241
      %s242 = sphi 0, %s239
      %s243 = sphi 0, %s242
      %s259 = sphi 0, %s243
    $region4: #{mynet_forward.1} parent=1 // loop_header_branch
      %21 = sbr.rel (%p19) target = $region8
    $region5: #{mynet_forward.1} parent=1 // loop_body
      %s23 = ssub.s32 %s18, 1
      %s24 = ssub.s32 %s18, 2
      %s31 = sadd.s32 1, %s26
      %p32 = scmp.ge.s32.totalorder %s31, 4
      %s33 = scalar_select %p32, 0, %s31
      %s34 = sadd.s32 1, %s25
      %s35 = scalar_select %p32, %s34, %s25
      %p36 = scmp.ge.s32.totalorder %s35, 1
      %s37 = scalar_select %p36, 0, %s35
      %s38 = ssub.s32 %s25, %s37
      %p39 = scmp.eq.s32.totalorder %s38, 0
      %s41 = sadd.s32 %s40, 1
      %s42 = scalar_select %p39, %s40, %s41
      %p45 = pneg %p39
      %p46 = scmp.eq.s32.totalorder %s18, 3
      %p47 = por %p45, %p46
      %p48 = scmp.ne.s32.totalorder %s40, %s43
      %p49 = scmp.eq.s32.totalorder %s18, 0
      %p50 = por %p48, %p49
      %p51 = scmp.ne.s32.totalorder %s40, %s43
      %p52 = scmp.eq.s32.totalorder %s23, 3
      %p53 = por %p51, %p52
      %p54 = scmp.ne.s32.totalorder %s43, %s44
      %p55 = scmp.eq.s32.totalorder %s23, 0
      %p56 = por %p54, %p55
      %p57 = scmp.ne.s32.totalorder %s43, %s44
      %p58 = scmp.eq.s32.totalorder %s24, 3
      %p59 = por %p57, %p58
      %p61 = scmp.ne.s32.totalorder %s44, %s60
      %p62 = scmp.eq.s32.totalorder %s24, 0
      %p63 = por %p61, %p62
      %s65 = sadd.s32 %s64, 1
      %p68 = scmp.eq.s32.totalorder %s18, 3
      %p69 = scmp.ne.s32.totalorder %s64, %s66
      %p70 = scmp.eq.s32.totalorder %s18, 0
      %p71 = por %p69, %p70
      %p72 = scmp.ne.s32.totalorder %s64, %s66
      %p73 = scmp.eq.s32.totalorder %s23, 3
      %p74 = por %p72, %p73
      %p75 = scmp.ne.s32.totalorder %s66, %s67
      %p76 = scmp.eq.s32.totalorder %s23, 0
      %p77 = por %p75, %p76
      %p78 = scmp.ne.s32.totalorder %s66, %s67
      %p79 = scmp.eq.s32.totalorder %s24, 3
      %p80 = por %p78, %p79
      %p82 = scmp.ne.s32.totalorder %s67, %s81
      %p83 = scmp.eq.s32.totalorder %s24, 0
      %p84 = por %p82, %p83
      %s86 = sadd.s32 %s85, 1
      %p89 = scmp.eq.s32.totalorder %s18, 3
      %p90 = scmp.ne.s32.totalorder %s85, %s87
      %p91 = scmp.eq.s32.totalorder %s18, 0
      %p92 = por %p90, %p91
      %p93 = scmp.ne.s32.totalorder %s85, %s87
      %p94 = scmp.eq.s32.totalorder %s23, 3
      %p95 = por %p93, %p94
      %p96 = scmp.ne.s32.totalorder %s87, %s88
      %p97 = scmp.eq.s32.totalorder %s23, 0
      %p98 = por %p96, %p97
      %p99 = scmp.ne.s32.totalorder %s87, %s88
      %p100 = scmp.eq.s32.totalorder %s24, 3
      %p101 = por %p99, %p100
      %p103 = scmp.ne.s32.totalorder %s88, %s102
      %p104 = scmp.eq.s32.totalorder %s24, 0
      %p105 = por %p103, %p104
      %s106 = ssub.s32 %s26, %s33
      %p107 = scmp.eq.s32.totalorder %s106, 0
      %s109 = sadd.s32 %s108, 1
      %s110 = scalar_select %p107, %s108, %s109
      %p113 = pneg %p107
      %p114 = scmp.eq.s32.totalorder %s18, 3
      %p115 = por %p113, %p114
      %p116 = scmp.ne.s32.totalorder %s108, %s111
      %p117 = scmp.eq.s32.totalorder %s18, 0
      %p118 = por %p116, %p117
      %p119 = scmp.ne.s32.totalorder %s108, %s111
      %p120 = scmp.eq.s32.totalorder %s23, 3
      %p121 = por %p119, %p120
      %p122 = scmp.ne.s32.totalorder %s111, %s112
      %p123 = scmp.eq.s32.totalorder %s23, 0
      %p124 = por %p122, %p123
      %p125 = scmp.ne.s32.totalorder %s111, %s112
      %p126 = scmp.eq.s32.totalorder %s24, 3
      %p127 = por %p125, %p126
      %p129 = scmp.ne.s32.totalorder %s112, %s128
      %p130 = scmp.eq.s32.totalorder %s24, 0
      %p131 = por %p129, %p130
      %s133 = sadd.s32 %s132, 1
      %p136 = scmp.eq.s32.totalorder %s18, 3
      %p137 = scmp.ne.s32.totalorder %s132, %s134
      %p138 = scmp.eq.s32.totalorder %s18, 0
      %p139 = por %p137, %p138
      %p140 = scmp.ne.s32.totalorder %s132, %s134
      %p141 = scmp.eq.s32.totalorder %s23, 3
      %p142 = por %p140, %p141
      %p143 = scmp.ne.s32.totalorder %s134, %s135
      %p144 = scmp.eq.s32.totalorder %s23, 0
      %p145 = por %p143, %p144
      %p146 = scmp.ne.s32.totalorder %s134, %s135
      %p147 = scmp.eq.s32.totalorder %s24, 3
      %p148 = por %p146, %p147
      %p150 = scmp.ne.s32.totalorder %s135, %s149
      %p151 = scmp.eq.s32.totalorder %s24, 0
      %p152 = por %p150, %p151
      %s154 = sadd.s32 %s153, 1
      %p157 = scmp.eq.s32.totalorder %s18, 3
      %p158 = scmp.ne.s32.totalorder %s153, %s155
      %p159 = scmp.eq.s32.totalorder %s18, 0
      %p160 = por %p158, %p159
      %p161 = scmp.ne.s32.totalorder %s153, %s155
      %p162 = scmp.eq.s32.totalorder %s23, 3
      %p163 = por %p161, %p162
      %p164 = scmp.ne.s32.totalorder %s155, %s156
      %p165 = scmp.eq.s32.totalorder %s23, 0
      %p166 = por %p164, %p165
      %p167 = scmp.ne.s32.totalorder %s155, %s156
      %p168 = scmp.eq.s32.totalorder %s24, 3
      %p169 = por %p167, %p168
      %p171 = scmp.ne.s32.totalorder %s156, %s170
      %p172 = scmp.eq.s32.totalorder %s24, 0
      %p173 = por %p171, %p172
      %s175 = sadd.s32 %s174, 1
      %p178 = scmp.eq.s32.totalorder %s18, 3
      %p179 = scmp.ne.s32.totalorder %s174, %s176
      %p180 = scmp.eq.s32.totalorder %s18, 0
      %p181 = por %p179, %p180
      %p182 = scmp.ne.s32.totalorder %s174, %s176
      %p183 = scmp.eq.s32.totalorder %s23, 3
      %p184 = por %p182, %p183
      %p185 = scmp.ne.s32.totalorder %s176, %s177
      %p186 = scmp.eq.s32.totalorder %s23, 0
      %p187 = por %p185, %p186
      %p188 = scmp.ne.s32.totalorder %s176, %s177
      %p189 = scmp.eq.s32.totalorder %s24, 3
      %p190 = por %p188, %p189
      %p192 = scmp.ne.s32.totalorder %s177, %s191
      %p193 = scmp.eq.s32.totalorder %s24, 0
      %p194 = por %p192, %p193
      %s196 = sadd.s32 %s195, 1
      %p199 = scmp.eq.s32.totalorder %s18, 3
      %p200 = scmp.ne.s32.totalorder %s195, %s197
      %p201 = scmp.eq.s32.totalorder %s18, 0
      %p202 = por %p200, %p201
      %p203 = scmp.ne.s32.totalorder %s195, %s197
      %p204 = scmp.eq.s32.totalorder %s23, 3
      %p205 = por %p203, %p204
      %p206 = scmp.ne.s32.totalorder %s197, %s198
      %p207 = scmp.eq.s32.totalorder %s23, 0
      %p208 = por %p206, %p207
      %p209 = scmp.ne.s32.totalorder %s197, %s198
      %p210 = scmp.eq.s32.totalorder %s24, 3
      %p211 = por %p209, %p210
      %p213 = scmp.ne.s32.totalorder %s198, %s212
      %p214 = scmp.eq.s32.totalorder %s24, 0
      %p215 = por %p213, %p214
      %s217 = sadd.s32 %s216, 1
      %p220 = scmp.eq.s32.totalorder %s18, 3
      %p221 = scmp.ne.s32.totalorder %s216, %s218
      %p222 = scmp.eq.s32.totalorder %s18, 0
      %p223 = por %p221, %p222
      %p224 = scmp.ne.s32.totalorder %s216, %s218
      %p225 = scmp.eq.s32.totalorder %s23, 3
      %p226 = por %p224, %p225
      %p227 = scmp.ne.s32.totalorder %s218, %s219
      %p228 = scmp.eq.s32.totalorder %s23, 0
      %p229 = por %p227, %p228
      %p230 = scmp.ne.s32.totalorder %s218, %s219
      %p231 = scmp.eq.s32.totalorder %s24, 3
      %p232 = por %p230, %p231
      %p234 = scmp.ne.s32.totalorder %s219, %s233
      %p235 = scmp.eq.s32.totalorder %s24, 0
      %p236 = por %p234, %p235
      %s237 = ssub.s32 %s25, %s37
      %p238 = scmp.eq.s32.totalorder %s237, 0
      %s240 = sadd.s32 %s239, 1
      %s241 = scalar_select %p238, %s239, %s240
      %p244 = pneg %p238
      %p245 = scmp.eq.s32.totalorder %s18, 3
      %p246 = por %p244, %p245
      %p247 = scmp.ne.s32.totalorder %s239, %s242
      %p248 = scmp.eq.s32.totalorder %s18, 0
      %p249 = por %p247, %p248
      %p250 = scmp.ne.s32.totalorder %s239, %s242
      %p251 = scmp.eq.s32.totalorder %s23, 3
      %p252 = por %p250, %p251
      %p253 = scmp.ne.s32.totalorder %s242, %s243
      %p254 = scmp.eq.s32.totalorder %s23, 0
      %p255 = por %p253, %p254
      %p256 = scmp.ne.s32.totalorder %s242, %s243
      %p257 = scmp.eq.s32.totalorder %s24, 3
      %p258 = por %p256, %p257
      %p260 = scmp.ne.s32.totalorder %s243, %s259
      %p261 = scmp.eq.s32.totalorder %s24, 0
      %p262 = por %p260, %p261
      %p263 = scmp.le.s32.totalorder 1, %s18
      %p264 = scmp.lt.s32.totalorder %s18, 5
      %p265 = pnand %p263, %p264
      %p266 = pneg %p265
      // Predicated region
      $region9: #{mynet_forward.1} parent=5 // pred_check
        _
      $region10: #{mynet_forward.1} parent=5 // pred_check_branch
        %268 = sbr.rel (%p265) target = $region12
      $region11: #{mynet_forward.1} parent=5 // pred_region
        %s269 = ssub.s32 %s18, 1
        // Predicated region
        $region13: #{mynet_forward.1} parent=11 // pred_check
          %p270 = pneg %p56
        $region14: #{mynet_forward.1} parent=11 // pred_check_branch
          %272 = sbr.rel (%p270) target = $region16
        $region15: #{mynet_forward.1} parent=11 // pred_region
          %p273 = scmp.lt.s32.totalorder %s27, 0
          %s274 = scalar_select %p273, %s27, 0
          %s275 = smul.addr %s274, 2
          %s276 = smul.addr %s275, 8
          %s277 = scalar_lea.vmem %s0, %s276
        $region16: #{mynet_forward.1} parent=11 // pred_fallthru
          _
        // Predicated region
        $region17: #{mynet_forward.1} parent=11 // pred_check
          %p278 = pneg %p77
        $region18: #{mynet_forward.1} parent=11 // pred_check_branch
          %280 = sbr.rel (%p278) target = $region20
        $region19: #{mynet_forward.1} parent=11 // pred_region
          %s282 = ssub.s32 16, 16
          %283 = vsyncadd [#allocation5], %s282
          %s285 = sshll.u32 %s1, 4
          %s286 = int_to_ptr.vmem [resolvable:$true] %s285
          %288 = dma.vmem_to_smem %s286, 16, [#allocation4], [#allocation5]
        $region20: #{mynet_forward.1} parent=11 // pred_fallthru
          _
        // Predicated region
        $region21: #{mynet_forward.1} parent=11 // pred_check
          %p289 = pneg %p98
        $region22: #{mynet_forward.1} parent=11 // pred_check_branch
          %291 = sbr.rel (%p289) target = $region24
        $region23: #{mynet_forward.1} parent=11 // pred_region
          %s293 = ssub.s32 16, 16
          %294 = vsyncadd [#allocation7], %s293
          %s296 = sshll.u32 %s2, 4
          %s297 = int_to_ptr.vmem [resolvable:$true] %s296
          %299 = dma.vmem_to_smem %s297, 16, [#allocation6], [#allocation7]
        $region24: #{mynet_forward.1} parent=11 // pred_fallthru
          _
        // Predicated region
        $region25: #{mynet_forward.1} parent=11 // pred_check
          %p300 = pneg %p145
        $region26: #{mynet_forward.1} parent=11 // pred_check_branch
          %302 = sbr.rel (%p300) target = $region28
        $region27: #{mynet_forward.1} parent=11 // pred_region
          _
        $region28: #{mynet_forward.1} parent=11 // pred_fallthru
          _
        // Predicated region
        $region29: #{mynet_forward.1} parent=11 // pred_check
          %p303 = pneg %p166
        $region30: #{mynet_forward.1} parent=11 // pred_check_branch
          %305 = sbr.rel (%p303) target = $region32
        $region31: #{mynet_forward.1} parent=11 // pred_region
          _
        $region32: #{mynet_forward.1} parent=11 // pred_fallthru
          _
        // Predicated region
        $region33: #{mynet_forward.1} parent=11 // pred_check
          %p306 = pneg %p187
        $region34: #{mynet_forward.1} parent=11 // pred_check_branch
          %308 = sbr.rel (%p306) target = $region36
        $region35: #{mynet_forward.1} parent=11 // pred_region
          _
        $region36: #{mynet_forward.1} parent=11 // pred_fallthru
          _
        // Predicated region
        $region37: #{mynet_forward.1} parent=11 // pred_check
          %p309 = pneg %p208
        $region38: #{mynet_forward.1} parent=11 // pred_check_branch
          %311 = sbr.rel (%p309) target = $region40
        $region39: #{mynet_forward.1} parent=11 // pred_region
          _
        $region40: #{mynet_forward.1} parent=11 // pred_fallthru
          _
        // Predicated region
        $region41: #{mynet_forward.1} parent=11 // pred_check
          %p312 = pneg %p229
        $region42: #{mynet_forward.1} parent=11 // pred_check_branch
          %314 = sbr.rel (%p312) target = $region44
        $region43: #{mynet_forward.1} parent=11 // pred_region
          _
        $region44: #{mynet_forward.1} parent=11 // pred_fallthru
          _
      $region12: #{mynet_forward.1} parent=5 // pred_fallthru
        _
      %p315 = scmp.lt.s32.totalorder %s18, 4
      // Predicated region
      $region45: #{mynet_forward.1} parent=5 // pred_check
        %p316 = pneg %p315
      $region46: #{mynet_forward.1} parent=5 // pred_check_branch
        %318 = sbr.rel (%p316) target = $region48
      $region47: #{mynet_forward.1} parent=5 // pred_region
        // Predicated region
        $region49: #{mynet_forward.1} parent=47 // pred_check
          %p319 = pneg %p118
        $region50: #{mynet_forward.1} parent=47 // pred_check_branch
          %321 = sbr.rel (%p319) target = $region52
        $region51: #{mynet_forward.1} parent=47 // pred_region
          %s322 = smul.u32 8, %s26
          %p323 = scmp.lt.s32.totalorder %s322, 31
          %s324 = scalar_select %p323, %s322, 31
          %s325 = smul.addr %s324, 16
          %s326 = smul.addr %s325, 4
          %s327 = scalar_lea.vmem %s3, %s326
          %s328 = smul.u32 8, %s26
        $region52: #{mynet_forward.1} parent=47 // pred_fallthru
          _
      $region48: #{mynet_forward.1} parent=5 // pred_fallthru
        _
      %p329 = scmp.le.s32.totalorder 1, %s18
      %p330 = scmp.lt.s32.totalorder %s18, 5
      %p331 = pnand %p329, %p330
      %p332 = pneg %p331
      // Predicated region
      $region53: #{mynet_forward.1} parent=5 // pred_check
        _
      $region54: #{mynet_forward.1} parent=5 // pred_check_branch
        %334 = sbr.rel (%p331) target = $region56
      $region55: #{mynet_forward.1} parent=5 // pred_region
        %s335 = ssub.s32 %s18, 1
        // Predicated region
        $region57: #{mynet_forward.1} parent=55 // pred_check
          %p336 = pneg %p77
        $region58: #{mynet_forward.1} parent=55 // pred_check_branch
          %338 = sbr.rel (%p336) target = $region60
        $region59: #{mynet_forward.1} parent=55 // pred_region
          %339 = dma.done [#allocation5], 16
        $region60: #{mynet_forward.1} parent=55 // pred_fallthru
          _
        // Predicated region
        $region61: #{mynet_forward.1} parent=55 // pred_check
          %p340 = pneg %p98
        $region62: #{mynet_forward.1} parent=55 // pred_check_branch
          %342 = sbr.rel (%p340) target = $region64
        $region63: #{mynet_forward.1} parent=55 // pred_region
          %343 = dma.done [#allocation7], 16
        $region64: #{mynet_forward.1} parent=55 // pred_fallthru
          _
        %344 = sfence
        %p345 = scmp.lt.s32.totalorder %s27, 0
        %s346 = scalar_select %p345, %s27, 0
        %s347 = smul.addr %s346, 2
        %s348 = smul.addr %s347, 8
        %s349 = scalar_lea.vmem %s0, %s348
        %p350 = pneg %p56
        %p351 = pneg %p53
        %p352 = pneg %p77
        %p353 = pneg %p74
        %p354 = pneg %p98
        %p355 = pneg %p95
        %s356 = smul.u32 8, %s28
        %p357 = scmp.lt.s32.totalorder %s356, 31
        %s358 = scalar_select %p357, %s356, 31
        %s359 = smul.addr %s358, 16
        %s360 = smul.addr %s359, 4
        %s361 = scalar_lea.vmem %s3, %s360
        %p362 = pneg %p124
        %p363 = pneg %p121
        %p364 = pneg %p145
        %p365 = pneg %p142
        %p366 = pneg %p166
        %p367 = pneg %p163
        %p368 = pneg %p187
        %p369 = pneg %p184
        %p370 = pneg %p208
        %p371 = pneg %p205
        %p372 = pneg %p229
        %p373 = pneg %p226
        %p374 = pneg %p255
        %p375 = pneg %p252
        %p376 = scmp.lt.s32.totalorder %s27, 0
        %s377 = scalar_select %p376, %s27, 0
        %s378 = smul.addr %s377, 8
        %s379 = scalar_lea.vmem %s9, %s378
        %p380 = scmp.lt.s32.totalorder %s27, 0
        %s381 = scalar_select %p380, %s27, 0
        %s382 = smul.addr %s381, 2
        %s383 = smul.addr %s382, 8
        %s384 = scalar_lea.vmem %s0, %s383
        %s385 = smul.u32 8, %s28
        %p386 = scmp.lt.s32.totalorder %s385, 31
        %s387 = scalar_select %p386, %s385, 31
        %s388 = smul.addr %s387, 16
        %s389 = smul.addr %s388, 4
        %s390 = scalar_lea.vmem %s3, %s389
        %s391 = smul.u32 8, %s28
        %p392 = scmp.lt.s32.totalorder %s27, 0
        %s393 = scalar_select %p392, %s27, 0
        %s394 = smul.addr %s393, 8
        %s395 = scalar_lea.vmem %s9, %s394
        %p397 = scmp.eq.s32.totalorder %s28, 0
        // Predicated region
        $region65: #{mynet_forward.1} parent=55 // pred_check
          %p398 = pneg %p397
        $region66: #{mynet_forward.1} parent=55 // pred_check_branch
          %400 = sbr.rel (%p398) target = $region68
        $region67: #{mynet_forward.1} parent=55 // pred_region
          %vm401 = vcmask 523264
          %402 = vst.msk [vmem:[#allocation2] sm:$0xff] %vm401, 0.0
        $region68: #{mynet_forward.1} parent=55 // pred_fallthru
          _
        %v403 = vld [vmem:[%s384] sm:$0xff]
        %v404 = vld [vmem:[%s384 + $0x8] sm:$0xff]
        %s405 = scalar_lea.vmem %s384, 16
        %v406 = vld [vmem:[%s405] sm:$0xff]
        %v407 = vld [vmem:[%s405 + $0x8] sm:$0xff]
        %s408 = scalar_lea.vmem %s384, 32
        %v409 = vld [vmem:[%s408] sm:$0xff]
        %v410 = vld [vmem:[%s408 + $0x8] sm:$0xff]
        %s411 = scalar_lea.vmem %s384, 48
        %v412 = vld [vmem:[%s411] sm:$0xff]
        %v413 = vld [vmem:[%s411 + $0x8] sm:$0xff]
        %s414 = scalar_lea.vmem %s384, 64
        %v415 = vld [vmem:[%s414] sm:$0xff]
        %v416 = vld [vmem:[%s414 + $0x8] sm:$0xff]
        %s417 = scalar_lea.vmem %s384, 80
        %v418 = vld [vmem:[%s417] sm:$0xff]
        %v419 = vld [vmem:[%s417 + $0x8] sm:$0xff]
        %s420 = smul.u32 %s28, 8
        %s421 = smul.u32 %s28, 24
        %s422 = sld [smem:[#allocation4 + %s421]]
        %s423 = sadd.s32 %s421, 1
        %s424 = sld [smem:[#allocation4 + %s423]]
        %s425 = sadd.s32 %s421, 2
        %s426 = sld [smem:[#allocation4 + %s425]]
        %s427 = sld [smem:[#allocation6 + %s420]]
        %v428 = vstv %s422
        %v429 = vmul.f32 %v403, %v428
        %v430 = vmul.f32 %v404, %v428
        %v431 = vstv %s424
        %v432 = vmul.f32 %v406, %v431
        %v433 = vmul.f32 %v407, %v431
        %v434 = vadd.f32 %v429, %v432
        %v435 = vadd.f32 %v430, %v433
        %v436 = vstv %s426
        %v437 = vmul.f32 %v409, %v436
        %v438 = vmul.f32 %v410, %v436
        %v439 = vadd.f32 %v434, %v437
        %v440 = vadd.f32 %v435, %v438
        %v441 = vstv %s427
        %v442 = vadd.f32 %v439, %v441
        %v443 = vadd.f32 %v440, %v441
        %v444 = vmul.f32 %v412, %v428
        %v445 = vmul.f32 %v413, %v428
        %v446 = vmul.f32 %v415, %v431
        %v447 = vmul.f32 %v416, %v431
        %v448 = vadd.f32 %v444, %v446
        %v449 = vadd.f32 %v445, %v447
        %v450 = vmul.f32 %v418, %v436
        %v451 = vmul.f32 %v419, %v436
        %v452 = vadd.f32 %v448, %v450
        %v453 = vadd.f32 %v449, %v451
        %v454 = vadd.f32 %v452, %v441
        %v455 = vadd.f32 %v453, %v441
        %v456 = vmax.f32 %v442, %v454
        %v457 = vmax.f32 %v443, %v455
        %v458 = vpack.c.bf16 %v456, %v456
        %v459 = vpack.c.bf16 %v457, %v457
        %v460 = vld [vmem:[%s390] sm:$0xff]
        %v461 = vld [vmem:[%s390 + $0x8] sm:$0xff]
        %v462 = vld [vmem:[%s390 + $0x10] sm:$0xff]
        %v463 = vld [vmem:[%s390 + $0x18] sm:$0xff]
        %v464 = vld [vmem:[%s390 + $0x20] sm:$0xff]
        %v465 = vld [vmem:[%s390 + $0x28] sm:$0xff]
        %v466 = vld [vmem:[%s390 + $0x30] sm:$0xff]
        %v467 = vld [vmem:[%s390 + $0x38] sm:$0xff]
        %s468 = sadd.s32 %s420, 1
        %s469 = smul.u32 %s468, 3
        %s470 = sld [smem:[#allocation4 + %s469]]
        %s471 = sadd.s32 %s469, 1
        %s472 = sld [smem:[#allocation4 + %s471]]
        %s473 = sadd.s32 %s469, 2
        %s474 = sld [smem:[#allocation4 + %s473]]
        %s475 = sld [smem:[#allocation6 + %s468]]
        %v476 = vstv %s470
        %v477 = vmul.f32 %v403, %v476
        %v478 = vmul.f32 %v404, %v476
        %v479 = vstv %s472
        %v480 = vmul.f32 %v406, %v479
        %v481 = vmul.f32 %v407, %v479
        %v482 = vadd.f32 %v477, %v480
        %v483 = vadd.f32 %v478, %v481
        %v484 = vstv %s474
        %v485 = vmul.f32 %v409, %v484
        %v486 = vmul.f32 %v410, %v484
        %v487 = vadd.f32 %v482, %v485
        %v488 = vadd.f32 %v483, %v486
        %v489 = vstv %s475
        %v490 = vadd.f32 %v487, %v489
        %v491 = vadd.f32 %v488, %v489
        %v492 = vmul.f32 %v412, %v476
        %v493 = vmul.f32 %v413, %v476
        %v494 = vmul.f32 %v415, %v479
        %v495 = vmul.f32 %v416, %v479
        %v496 = vadd.f32 %v492, %v494
        %v497 = vadd.f32 %v493, %v495
        %v498 = vmul.f32 %v418, %v484
        %v499 = vmul.f32 %v419, %v484
        %v500 = vadd.f32 %v496, %v498
        %v501 = vadd.f32 %v497, %v499
        %v502 = vadd.f32 %v500, %v489
        %v503 = vadd.f32 %v501, %v489
        %v504 = vmax.f32 %v490, %v502
        %v505 = vmax.f32 %v491, %v503
        %v506 = vpack.c.bf16 %v504, %v504
        %v507 = vpack.c.bf16 %v505, %v505
        %s508 = scalar_lea.vmem %s390, 64
        %v509 = vld [vmem:[%s508] sm:$0xff]
        %v510 = vld [vmem:[%s508 + $0x8] sm:$0xff]
        %v511 = vld [vmem:[%s508 + $0x10] sm:$0xff]
        %v512 = vld [vmem:[%s508 + $0x18] sm:$0xff]
        %v513 = vld [vmem:[%s508 + $0x20] sm:$0xff]
        %v514 = vld [vmem:[%s508 + $0x28] sm:$0xff]
        %v515 = vld [vmem:[%s508 + $0x30] sm:$0xff]
        %v516 = vld [vmem:[%s508 + $0x38] sm:$0xff]
        %v525 = vunpack.c.l.b16 %v509
        %v526 = vunpack.c.h.b16 %v509
        %v527 = vunpack.c.l.b16 %v510
        %v528 = vunpack.c.h.b16 %v510
        %v529 = vunpack.c.l.b16 %v511
        %v530 = vunpack.c.h.b16 %v511
        %v531 = vunpack.c.l.b16 %v512
        %v532 = vunpack.c.h.b16 %v512
        %v533 = vunpack.c.l.b16 %v513
        %v534 = vunpack.c.h.b16 %v513
        %v535 = vunpack.c.l.b16 %v514
        %v536 = vunpack.c.h.b16 %v514
        %v537 = vunpack.c.l.b16 %v515
        %v538 = vunpack.c.h.b16 %v515
        %v539 = vunpack.c.l.b16 %v516
        %v540 = vunpack.c.h.b16 %v516
        %v541 = vpack.c.b16 %v527, %v525
        %v542 = vpack.c.b16 %v528, %v526
        %v543 = vpack.c.b16 %v531, %v529
        %v544 = vpack.c.b16 %v532, %v530
        %v545 = vpack.c.b16 %v535, %v533
        %v546 = vpack.c.b16 %v536, %v534
        %v547 = vpack.c.b16 %v539, %v537
        %v548 = vpack.c.b16 %v540, %v538
        %vm553 = vcmask 695296
        %v555 = vsel %vm553, %v507, 0
        %v558 = vsel %vm553, %v542, 0
        %v561 = vsel %vm553, %v544, 0
        %v564 = vsel %vm553, %v546, 0
        %v567 = vsel %vm553, %v548, 0
        %569 = vmatprep.subr.bf16.mxu0 %v558
        %570 = vmatpush1.bf16.xpose.msra.mxu0 %v541
        %571 = vmatprep.subr.bf16.mxu0 %v561
        %572 = vmatpush1.bf16.xpose.msra.mxu0 %v543
        %573 = vmatprep.subr.bf16.mxu0 %v564
        %574 = vmatpush1.bf16.xpose.msra.mxu0 %v545
        %575 = vmatprep.subr.bf16.mxu0 %v567
        %576 = vmatpush1.bf16.xpose.msra.mxu0 %v547
        %577 = vmatprep.subr.bf16.mxu0 0
        %578 = vmatpush1.bf16.xpose.msra.mxu0 0
        %579 = vmatprep.subr.bf16.mxu0 0
        %580 = vmatpush1.bf16.xpose.msra.mxu0 0
        %581 = vmatprep.subr.bf16.mxu0 0
        %582 = vmatpush1.bf16.xpose.msra.mxu0 0
        %583 = vmatprep.subr.bf16.mxu0 0
        %584 = vmatpush1.bf16.xpose.msra.mxu0 0
        %585 = vmatprep.subr.bf16.mxu0 0
        %586 = vmatpush1.bf16.xpose.msra.mxu0 0
        %587 = vmatprep.subr.bf16.mxu0 0
        %588 = vmatpush1.bf16.xpose.msra.mxu0 0
        %589 = vmatprep.subr.bf16.mxu0 0
        %590 = vmatpush1.bf16.xpose.msra.mxu0 0
        %591 = vmatprep.subr.bf16.mxu0 0
        %592 = vmatpush1.bf16.xpose.msra.mxu0 0
        %593 = vmatprep.subr.bf16.mxu0 0
        %594 = vmatpush1.bf16.xpose.msra.mxu0 0
        %595 = vmatprep.subr.bf16.mxu0 0
        %596 = vmatpush1.bf16.xpose.msra.mxu0 0
        %597 = vmatprep.subr.bf16.mxu0 0
        %598 = vmatpush1.bf16.xpose.msra.mxu0 0
        %599 = vmatprep.subr.bf16.mxu0 0
        %600 = vmatpush1.bf16.xpose.msra.mxu0 0
        %601 = vmatprep.mubr.bf16.mxu0 %v555
        %602 = vmatmul.mubr.bf16.gmra.mrb[0].mxu0 %v506
        %v603 = vpop.f32.mrb[0].mxu0
        %v604 = vadd.f32 0.0, %v603
        %v605 = vpop.f32.mrb[0].mxu0
        %v606 = vpop.f32.mrb[0].mxu0
        %v607 = vpop.f32.mrb[0].mxu0
        %608 = vdwg.mxu0
        %v617 = vunpack.c.l.b16 %v460
        %v618 = vunpack.c.h.b16 %v460
        %v619 = vunpack.c.l.b16 %v461
        %v620 = vunpack.c.h.b16 %v461
        %v621 = vunpack.c.l.b16 %v462
        %v622 = vunpack.c.h.b16 %v462
        %v623 = vunpack.c.l.b16 %v463
        %v624 = vunpack.c.h.b16 %v463
        %v625 = vunpack.c.l.b16 %v464
        %v626 = vunpack.c.h.b16 %v464
        %v627 = vunpack.c.l.b16 %v465
        %v628 = vunpack.c.h.b16 %v465
        %v629 = vunpack.c.l.b16 %v466
        %v630 = vunpack.c.h.b16 %v466
        %v631 = vunpack.c.l.b16 %v467
        %v632 = vunpack.c.h.b16 %v467
        %v633 = vpack.c.b16 %v619, %v617
        %v634 = vpack.c.b16 %v620, %v618
        %v635 = vpack.c.b16 %v623, %v621
        %v636 = vpack.c.b16 %v624, %v622
        %v637 = vpack.c.b16 %v627, %v625
        %v638 = vpack.c.b16 %v628, %v626
        %v639 = vpack.c.b16 %v631, %v629
        %v640 = vpack.c.b16 %v632, %v630
        %v646 = vsel %vm553, %v459, 0
        %v649 = vsel %vm553, %v634, 0
        %v652 = vsel %vm553, %v636, 0
        %v655 = vsel %vm553, %v638, 0
        %v658 = vsel %vm553, %v640, 0
        %660 = vmatprep.subr.bf16.mxu0 %v649
        %661 = vmatpush1.bf16.xpose.msra.mxu0 %v633
        %662 = vmatprep.subr.bf16.mxu0 %v652
        %663 = vmatpush1.bf16.xpose.msra.mxu0 %v635
        %664 = vmatprep.subr.bf16.mxu0 %v655
        %665 = vmatpush1.bf16.xpose.msra.mxu0 %v637
        %666 = vmatprep.subr.bf16.mxu0 %v658
        %667 = vmatpush1.bf16.xpose.msra.mxu0 %v639
        %668 = vmatprep.subr.bf16.mxu0 0
        %669 = vmatpush1.bf16.xpose.msra.mxu0 0
        %670 = vmatprep.subr.bf16.mxu0 0
        %671 = vmatpush1.bf16.xpose.msra.mxu0 0
        %672 = vmatprep.subr.bf16.mxu0 0
        %673 = vmatpush1.bf16.xpose.msra.mxu0 0
        %674 = vmatprep.subr.bf16.mxu0 0
        %675 = vmatpush1.bf16.xpose.msra.mxu0 0
        %676 = vmatprep.subr.bf16.mxu0 0
        %677 = vmatpush1.bf16.xpose.msra.mxu0 0
        %678 = vmatprep.subr.bf16.mxu0 0
        %679 = vmatpush1.bf16.xpose.msra.mxu0 0
        %680 = vmatprep.subr.bf16.mxu0 0
        %681 = vmatpush1.bf16.xpose.msra.mxu0 0
        %682 = vmatprep.subr.bf16.mxu0 0
        %683 = vmatpush1.bf16.xpose.msra.mxu0 0
        %684 = vmatprep.subr.bf16.mxu0 0
        %685 = vmatpush1.bf16.xpose.msra.mxu0 0
        %686 = vmatprep.subr.bf16.mxu0 0
        %687 = vmatpush1.bf16.xpose.msra.mxu0 0
        %688 = vmatprep.subr.bf16.mxu0 0
        %689 = vmatpush1.bf16.xpose.msra.mxu0 0
        %690 = vmatprep.subr.bf16.mxu0 0
        %691 = vmatpush1.bf16.xpose.msra.mxu0 0
        %692 = vmatprep.mubr.bf16.mxu0 %v646
        %693 = vmatmul.mubr.bf16.gmra.mrb[0].mxu0 %v458
        %v694 = vpop.f32.mrb[0].mxu0
        %v695 = vadd.f32 %v604, %v694
        %v696 = vpop.f32.mrb[0].mxu0
        %v697 = vpop.f32.mrb[0].mxu0
        %v698 = vpop.f32.mrb[0].mxu0
        %699 = vdwg.mxu0
        %s700 = sadd.s32 %s420, 2
        %s701 = smul.u32 %s700, 3
        %s702 = sld [smem:[#allocation4 + %s701]]
        %s703 = sadd.s32 %s701, 1
        %s704 = sld [smem:[#allocation4 + %s703]]
        %s705 = sadd.s32 %s701, 2
        %s706 = sld [smem:[#allocation4 + %s705]]
        %s707 = sld [smem:[#allocation6 + %s700]]
        %v708 = vstv %s702
        %v709 = vmul.f32 %v403, %v708
        %v710 = vmul.f32 %v404, %v708
        %v711 = vstv %s704
        %v712 = vmul.f32 %v406, %v711
        %v713 = vmul.f32 %v407, %v711
        %v714 = vadd.f32 %v709, %v712
        %v715 = vadd.f32 %v710, %v713
        %v716 = vstv %s706
        %v717 = vmul.f32 %v409, %v716
        %v718 = vmul.f32 %v410, %v716
        %v719 = vadd.f32 %v714, %v717
        %v720 = vadd.f32 %v715, %v718
        %v721 = vstv %s707
        %v722 = vadd.f32 %v719, %v721
        %v723 = vadd.f32 %v720, %v721
        %v724 = vmul.f32 %v412, %v708
        %v725 = vmul.f32 %v413, %v708
        %v726 = vmul.f32 %v415, %v711
        %v727 = vmul.f32 %v416, %v711
        %v728 = vadd.f32 %v724, %v726
        %v729 = vadd.f32 %v725, %v727
        %v730 = vmul.f32 %v418, %v716
        %v731 = vmul.f32 %v419, %v716
        %v732 = vadd.f32 %v728, %v730
        %v733 = vadd.f32 %v729, %v731
        %v734 = vadd.f32 %v732, %v721
        %v735 = vadd.f32 %v733, %v721
        %v736 = vmax.f32 %v722, %v734
        %v737 = vmax.f32 %v723, %v735
        %v738 = vpack.c.bf16 %v736, %v736
        %v739 = vpack.c.bf16 %v737, %v737
        %s740 = scalar_lea.vmem %s390, 128
        %v741 = vld [vmem:[%s740] sm:$0xff]
        %v742 = vld [vmem:[%s740 + $0x8] sm:$0xff]
        %v743 = vld [vmem:[%s740 + $0x10] sm:$0xff]
        %v744 = vld [vmem:[%s740 + $0x18] sm:$0xff]
        %v745 = vld [vmem:[%s740 + $0x20] sm:$0xff]
        %v746 = vld [vmem:[%s740 + $0x28] sm:$0xff]
        %v747 = vld [vmem:[%s740 + $0x30] sm:$0xff]
        %v748 = vld [vmem:[%s740 + $0x38] sm:$0xff]
        %v757 = vunpack.c.l.b16 %v741
        %v758 = vunpack.c.h.b16 %v741
        %v759 = vunpack.c.l.b16 %v742
        %v760 = vunpack.c.h.b16 %v742
        %v761 = vunpack.c.l.b16 %v743
        %v762 = vunpack.c.h.b16 %v743
        %v763 = vunpack.c.l.b16 %v744
        %v764 = vunpack.c.h.b16 %v744
        %v765 = vunpack.c.l.b16 %v745
        %v766 = vunpack.c.h.b16 %v745
        %v767 = vunpack.c.l.b16 %v746
        %v768 = vunpack.c.h.b16 %v746
        %v769 = vunpack.c.l.b16 %v747
        %v770 = vunpack.c.h.b16 %v747
        %v771 = vunpack.c.l.b16 %v748
        %v772 = vunpack.c.h.b16 %v748
        %v773 = vpack.c.b16 %v759, %v757
        %v774 = vpack.c.b16 %v760, %v758
        %v775 = vpack.c.b16 %v763, %v761
        %v776 = vpack.c.b16 %v764, %v762
        %v777 = vpack.c.b16 %v767, %v765
        %v778 = vpack.c.b16 %v768, %v766
        %v779 = vpack.c.b16 %v771, %v769
        %v780 = vpack.c.b16 %v772, %v770
        %v786 = vsel %vm553, %v739, 0
        %v789 = vsel %vm553, %v774, 0
        %v792 = vsel %vm553, %v776, 0
        %v795 = vsel %vm553, %v778, 0
        %v798 = vsel %vm553, %v780, 0
        %800 = vmatprep.subr.bf16.mxu0 %v789
        %801 = vmatpush1.bf16.xpose.msra.mxu0 %v773
        %802 = vmatprep.subr.bf16.mxu0 %v792
        %803 = vmatpush1.bf16.xpose.msra.mxu0 %v775
        %804 = vmatprep.subr.bf16.mxu0 %v795
        %805 = vmatpush1.bf16.xpose.msra.mxu0 %v777
        %806 = vmatprep.subr.bf16.mxu0 %v798
        %807 = vmatpush1.bf16.xpose.msra.mxu0 %v779
        %808 = vmatprep.subr.bf16.mxu0 0
        %809 = vmatpush1.bf16.xpose.msra.mxu0 0
        %810 = vmatprep.subr.bf16.mxu0 0
        %811 = vmatpush1.bf16.xpose.msra.mxu0 0
        %812 = vmatprep.subr.bf16.mxu0 0
        %813 = vmatpush1.bf16.xpose.msra.mxu0 0
        %814 = vmatprep.subr.bf16.mxu0 0
        %815 = vmatpush1.bf16.xpose.msra.mxu0 0
        %816 = vmatprep.subr.bf16.mxu0 0
        %817 = vmatpush1.bf16.xpose.msra.mxu0 0
        %818 = vmatprep.subr.bf16.mxu0 0
        %819 = vmatpush1.bf16.xpose.msra.mxu0 0
        %820 = vmatprep.subr.bf16.mxu0 0
        %821 = vmatpush1.bf16.xpose.msra.mxu0 0
        %822 = vmatprep.subr.bf16.mxu0 0
        %823 = vmatpush1.bf16.xpose.msra.mxu0 0
        %824 = vmatprep.subr.bf16.mxu0 0
        %825 = vmatpush1.bf16.xpose.msra.mxu0 0
        %826 = vmatprep.subr.bf16.mxu0 0
        %827 = vmatpush1.bf16.xpose.msra.mxu0 0
        %828 = vmatprep.subr.bf16.mxu0 0
        %829 = vmatpush1.bf16.xpose.msra.mxu0 0
        %830 = vmatprep.subr.bf16.mxu0 0
        %831 = vmatpush1.bf16.xpose.msra.mxu0 0
        %832 = vmatprep.mubr.bf16.mxu0 %v786
        %833 = vmatmul.mubr.bf16.gmra.mrb[0].mxu0 %v738
        %v834 = vpop.f32.mrb[0].mxu0
        %v835 = vadd.f32 0.0, %v834
        %v836 = vpop.f32.mrb[0].mxu0
        %v837 = vpop.f32.mrb[0].mxu0
        %v838 = vpop.f32.mrb[0].mxu0
        %839 = vdwg.mxu0
        %v840 = vadd.f32 %v695, %v835
        %s841 = sadd.s32 %s420, 3
        %s842 = smul.u32 %s841, 3
        %s843 = sld [smem:[#allocation4 + %s842]]
        %s844 = sadd.s32 %s842, 1
        %s845 = sld [smem:[#allocation4 + %s844]]
        %s846 = sadd.s32 %s842, 2
        %s847 = sld [smem:[#allocation4 + %s846]]
        %s848 = sld [smem:[#allocation6 + %s841]]
        %v849 = vstv %s843
        %v850 = vmul.f32 %v403, %v849
        %v851 = vmul.f32 %v404, %v849
        %v852 = vstv %s845
        %v853 = vmul.f32 %v406, %v852
        %v854 = vmul.f32 %v407, %v852
        %v855 = vadd.f32 %v850, %v853
        %v856 = vadd.f32 %v851, %v854
        %v857 = vstv %s847
        %v858 = vmul.f32 %v409, %v857
        %v859 = vmul.f32 %v410, %v857
        %v860 = vadd.f32 %v855, %v858
        %v861 = vadd.f32 %v856, %v859
        %v862 = vstv %s848
        %v863 = vadd.f32 %v860, %v862
        %v864 = vadd.f32 %v861, %v862
        %v865 = vmul.f32 %v412, %v849
        %v866 = vmul.f32 %v413, %v849
        %v867 = vmul.f32 %v415, %v852
        %v868 = vmul.f32 %v416, %v852
        %v869 = vadd.f32 %v865, %v867
        %v870 = vadd.f32 %v866, %v868
        %v871 = vmul.f32 %v418, %v857
        %v872 = vmul.f32 %v419, %v857
        %v873 = vadd.f32 %v869, %v871
        %v874 = vadd.f32 %v870, %v872
        %v875 = vadd.f32 %v873, %v862
        %v876 = vadd.f32 %v874, %v862
        %v877 = vmax.f32 %v863, %v875
        %v878 = vmax.f32 %v864, %v876
        %v879 = vpack.c.bf16 %v877, %v877
        %v880 = vpack.c.bf16 %v878, %v878
        %s881 = scalar_lea.vmem %s390, 192
        %v882 = vld [vmem:[%s881] sm:$0xff]
        %v883 = vld [vmem:[%s881 + $0x8] sm:$0xff]
        %v884 = vld [vmem:[%s881 + $0x10] sm:$0xff]
        %v885 = vld [vmem:[%s881 + $0x18] sm:$0xff]
        %v886 = vld [vmem:[%s881 + $0x20] sm:$0xff]
        %v887 = vld [vmem:[%s881 + $0x28] sm:$0xff]
        %v888 = vld [vmem:[%s881 + $0x30] sm:$0xff]
        %v889 = vld [vmem:[%s881 + $0x38] sm:$0xff]
        %v898 = vunpack.c.l.b16 %v882
        %v899 = vunpack.c.h.b16 %v882
        %v900 = vunpack.c.l.b16 %v883
        %v901 = vunpack.c.h.b16 %v883
        %v902 = vunpack.c.l.b16 %v884
        %v903 = vunpack.c.h.b16 %v884
        %v904 = vunpack.c.l.b16 %v885
        %v905 = vunpack.c.h.b16 %v885
        %v906 = vunpack.c.l.b16 %v886
        %v907 = vunpack.c.h.b16 %v886
        %v908 = vunpack.c.l.b16 %v887
        %v909 = vunpack.c.h.b16 %v887
        %v910 = vunpack.c.l.b16 %v888
        %v911 = vunpack.c.h.b16 %v888
        %v912 = vunpack.c.l.b16 %v889
        %v913 = vunpack.c.h.b16 %v889
        %v914 = vpack.c.b16 %v900, %v898
        %v915 = vpack.c.b16 %v901, %v899
        %v916 = vpack.c.b16 %v904, %v902
        %v917 = vpack.c.b16 %v905, %v903
        %v918 = vpack.c.b16 %v908, %v906
        %v919 = vpack.c.b16 %v909, %v907
        %v920 = vpack.c.b16 %v912, %v910
        %v921 = vpack.c.b16 %v913, %v911
        %v927 = vsel %vm553, %v880, 0
        %v930 = vsel %vm553, %v915, 0
        %v933 = vsel %vm553, %v917, 0
        %v936 = vsel %vm553, %v919, 0
        %v939 = vsel %vm553, %v921, 0
        %941 = vmatprep.subr.bf16.mxu0 %v930
        %942 = vmatpush1.bf16.xpose.msra.mxu0 %v914
        %943 = vmatprep.subr.bf16.mxu0 %v933
        %944 = vmatpush1.bf16.xpose.msra.mxu0 %v916
        %945 = vmatprep.subr.bf16.mxu0 %v936
        %946 = vmatpush1.bf16.xpose.msra.mxu0 %v918
        %947 = vmatprep.subr.bf16.mxu0 %v939
        %948 = vmatpush1.bf16.xpose.msra.mxu0 %v920
        %949 = vmatprep.subr.bf16.mxu0 0
        %950 = vmatpush1.bf16.xpose.msra.mxu0 0
        %951 = vmatprep.subr.bf16.mxu0 0
        %952 = vmatpush1.bf16.xpose.msra.mxu0 0
        %953 = vmatprep.subr.bf16.mxu0 0
        %954 = vmatpush1.bf16.xpose.msra.mxu0 0
        %955 = vmatprep.subr.bf16.mxu0 0
        %956 = vmatpush1.bf16.xpose.msra.mxu0 0
        %957 = vmatprep.subr.bf16.mxu0 0
        %958 = vmatpush1.bf16.xpose.msra.mxu0 0
        %959 = vmatprep.subr.bf16.mxu0 0
        %960 = vmatpush1.bf16.xpose.msra.mxu0 0
        %961 = vmatprep.subr.bf16.mxu0 0
        %962 = vmatpush1.bf16.xpose.msra.mxu0 0
        %963 = vmatprep.subr.bf16.mxu0 0
        %964 = vmatpush1.bf16.xpose.msra.mxu0 0
        %965 = vmatprep.subr.bf16.mxu0 0
        %966 = vmatpush1.bf16.xpose.msra.mxu0 0
        %967 = vmatprep.subr.bf16.mxu0 0
        %968 = vmatpush1.bf16.xpose.msra.mxu0 0
        %969 = vmatprep.subr.bf16.mxu0 0
        %970 = vmatpush1.bf16.xpose.msra.mxu0 0
        %971 = vmatprep.subr.bf16.mxu0 0
        %972 = vmatpush1.bf16.xpose.msra.mxu0 0
        %973 = vmatprep.mubr.bf16.mxu0 %v927
        %974 = vmatmul.mubr.bf16.gmra.mrb[0].mxu0 %v879
        %v975 = vpop.f32.mrb[0].mxu0
        %v976 = vadd.f32 0.0, %v975
        %v977 = vpop.f32.mrb[0].mxu0
        %v978 = vpop.f32.mrb[0].mxu0
        %v979 = vpop.f32.mrb[0].mxu0
        %980 = vdwg.mxu0
        %v981 = vadd.f32 %v840, %v976
        %s982 = sadd.s32 %s420, 4
        %s983 = smul.u32 %s982, 3
        %s984 = sld [smem:[#allocation4 + %s983]]
        %s985 = sadd.s32 %s983, 1
        %s986 = sld [smem:[#allocation4 + %s985]]
        %s987 = sadd.s32 %s983, 2
        %s988 = sld [smem:[#allocation4 + %s987]]
        %s989 = sld [smem:[#allocation6 + %s982]]
        %v990 = vstv %s984
        %v991 = vmul.f32 %v403, %v990
        %v992 = vmul.f32 %v404, %v990
        %v993 = vstv %s986
        %v994 = vmul.f32 %v406, %v993
        %v995 = vmul.f32 %v407, %v993
        %v996 = vadd.f32 %v991, %v994
        %v997 = vadd.f32 %v992, %v995
        %v998 = vstv %s988
        %v999 = vmul.f32 %v409, %v998
        %v1000 = vmul.f32 %v410, %v998
        %v1001 = vadd.f32 %v996, %v999
        %v1002 = vadd.f32 %v997, %v1000
        %v1003 = vstv %s989
        %v1004 = vadd.f32 %v1001, %v1003
        %v1005 = vadd.f32 %v1002, %v1003
        %v1006 = vmul.f32 %v412, %v990
        %v1007 = vmul.f32 %v413, %v990
        %v1008 = vmul.f32 %v415, %v993
        %v1009 = vmul.f32 %v416, %v993
        %v1010 = vadd.f32 %v1006, %v1008
        %v1011 = vadd.f32 %v1007, %v1009
        %v1012 = vmul.f32 %v418, %v998
        %v1013 = vmul.f32 %v419, %v998
        %v1014 = vadd.f32 %v1010, %v1012
        %v1015 = vadd.f32 %v1011, %v1013
        %v1016 = vadd.f32 %v1014, %v1003
        %v1017 = vadd.f32 %v1015, %v1003
        %v1018 = vmax.f32 %v1004, %v1016
        %v1019 = vmax.f32 %v1005, %v1017
        %v1020 = vpack.c.bf16 %v1018, %v1018
        %v1021 = vpack.c.bf16 %v1019, %v1019
        %s1022 = scalar_lea.vmem %s390, 256
        %v1023 = vld [vmem:[%s1022] sm:$0xff]
        %v1024 = vld [vmem:[%s1022 + $0x8] sm:$0xff]
        %v1025 = vld [vmem:[%s1022 + $0x10] sm:$0xff]
        %v1026 = vld [vmem:[%s1022 + $0x18] sm:$0xff]
        %v1027 = vld [vmem:[%s1022 + $0x20] sm:$0xff]
        %v1028 = vld [vmem:[%s1022 + $0x28] sm:$0xff]
        %v1029 = vld [vmem:[%s1022 + $0x30] sm:$0xff]
        %v1030 = vld [vmem:[%s1022 + $0x38] sm:$0xff]
        %v1039 = vunpack.c.l.b16 %v1023
        %v1040 = vunpack.c.h.b16 %v1023
        %v1041 = vunpack.c.l.b16 %v1024
        %v1042 = vunpack.c.h.b16 %v1024
        %v1043 = vunpack.c.l.b16 %v1025
        %v1044 = vunpack.c.h.b16 %v1025
        %v1045 = vunpack.c.l.b16 %v1026
        %v1046 = vunpack.c.h.b16 %v1026
        %v1047 = vunpack.c.l.b16 %v1027
        %v1048 = vunpack.c.h.b16 %v1027
        %v1049 = vunpack.c.l.b16 %v1028
        %v1050 = vunpack.c.h.b16 %v1028
        %v1051 = vunpack.c.l.b16 %v1029
        %v1052 = vunpack.c.h.b16 %v1029
        %v1053 = vunpack.c.l.b16 %v1030
        %v1054 = vunpack.c.h.b16 %v1030
        %v1055 = vpack.c.b16 %v1041, %v1039
        %v1056 = vpack.c.b16 %v1042, %v1040
        %v1057 = vpack.c.b16 %v1045, %v1043
        %v1058 = vpack.c.b16 %v1046, %v1044
        %v1059 = vpack.c.b16 %v1049, %v1047
        %v1060 = vpack.c.b16 %v1050, %v1048
        %v1061 = vpack.c.b16 %v1053, %v1051
        %v1062 = vpack.c.b16 %v1054, %v1052
        %v1068 = vsel %vm553, %v1021, 0
        %v1071 = vsel %vm553, %v1056, 0
        %v1074 = vsel %vm553, %v1058, 0
        %v1077 = vsel %vm553, %v1060, 0
        %v1080 = vsel %vm553, %v1062, 0
        %1082 = vmatprep.subr.bf16.mxu0 %v1071
        %1083 = vmatpush1.bf16.xpose.msra.mxu0 %v1055
        %1084 = vmatprep.subr.bf16.mxu0 %v1074
        %1085 = vmatpush1.bf16.xpose.msra.mxu0 %v1057
        %1086 = vmatprep.subr.bf16.mxu0 %v1077
        %1087 = vmatpush1.bf16.xpose.msra.mxu0 %v1059
        %1088 = vmatprep.subr.bf16.mxu0 %v1080
        %1089 = vmatpush1.bf16.xpose.msra.mxu0 %v1061
        %1090 = vmatprep.subr.bf16.mxu0 0
        %1091 = vmatpush1.bf16.xpose.msra.mxu0 0
        %1092 = vmatprep.subr.bf16.mxu0 0
        %1093 = vmatpush1.bf16.xpose.msra.mxu0 0
        %1094 = vmatprep.subr.bf16.mxu0 0
        %1095 = vmatpush1.bf16.xpose.msra.mxu0 0
        %1096 = vmatprep.subr.bf16.mxu0 0
        %1097 = vmatpush1.bf16.xpose.msra.mxu0 0
        %1098 = vmatprep.subr.bf16.mxu0 0
        %1099 = vmatpush1.bf16.xpose.msra.mxu0 0
        %1100 = vmatprep.subr.bf16.mxu0 0
        %1101 = vmatpush1.bf16.xpose.msra.mxu0 0
        %1102 = vmatprep.subr.bf16.mxu0 0
        %1103 = vmatpush1.bf16.xpose.msra.mxu0 0
        %1104 = vmatprep.subr.bf16.mxu0 0
        %1105 = vmatpush1.bf16.xpose.msra.mxu0 0
        %1106 = vmatprep.subr.bf16.mxu0 0
        %1107 = vmatpush1.bf16.xpose.msra.mxu0 0
        %1108 = vmatprep.subr.bf16.mxu0 0
        %1109 = vmatpush1.bf16.xpose.msra.mxu0 0
        %1110 = vmatprep.subr.bf16.mxu0 0
        %1111 = vmatpush1.bf16.xpose.msra.mxu0 0
        %1112 = vmatprep.subr.bf16.mxu0 0
        %1113 = vmatpush1.bf16.xpose.msra.mxu0 0
        %1114 = vmatprep.mubr.bf16.mxu0 %v1068
        %1115 = vmatmul.mubr.bf16.gmra.mrb[0].mxu0 %v1020
        %v1116 = vpop.f32.mrb[0].mxu0
        %v1117 = vadd.f32 0.0, %v1116
        %v1118 = vpop.f32.mrb[0].mxu0
        %v1119 = vpop.f32.mrb[0].mxu0
        %v1120 = vpop.f32.mrb[0].mxu0
        %1121 = vdwg.mxu0
        %v1122 = vadd.f32 %v981, %v1117
        %s1123 = sadd.s32 %s420, 5
        %s1124 = smul.u32 %s1123, 3
        %s1125 = sld [smem:[#allocation4 + %s1124]]
        %s1126 = sadd.s32 %s1124, 1
        %s1127 = sld [smem:[#allocation4 + %s1126]]
        %s1128 = sadd.s32 %s1124, 2
        %s1129 = sld [smem:[#allocation4 + %s1128]]
        %s1130 = sld [smem:[#allocation6 + %s1123]]
        %v1131 = vstv %s1125
        %v1132 = vmul.f32 %v403, %v1131
        %v1133 = vmul.f32 %v404, %v1131
        %v1134 = vstv %s1127
        %v1135 = vmul.f32 %v406, %v1134
        %v1136 = vmul.f32 %v407, %v1134
        %v1137 = vadd.f32 %v1132, %v1135
        %v1138 = vadd.f32 %v1133, %v1136
        %v1139 = vstv %s1129
        %v1140 = vmul.f32 %v409, %v1139
        %v1141 = vmul.f32 %v410, %v1139
        %v1142 = vadd.f32 %v1137, %v1140
        %v1143 = vadd.f32 %v1138, %v1141
        %v1144 = vstv %s1130
        %v1145 = vadd.f32 %v1142, %v1144
        %v1146 = vadd.f32 %v1143, %v1144
        %v1147 = vmul.f32 %v412, %v1131
        %v1148 = vmul.f32 %v413, %v1131
        %v1149 = vmul.f32 %v415, %v1134
        %v1150 = vmul.f32 %v416, %v1134
        %v1151 = vadd.f32 %v1147, %v1149
        %v1152 = vadd.f32 %v1148, %v1150
        %v1153 = vmul.f32 %v418, %v1139
        %v1154 = vmul.f32 %v419, %v1139
        %v1155 = vadd.f32 %v1151, %v1153
        %v1156 = vadd.f32 %v1152, %v1154
        %v1157 = vadd.f32 %v1155, %v1144
        %v1158 = vadd.f32 %v1156, %v1144
        %v1159 = vmax.f32 %v1145, %v1157
        %v1160 = vmax.f32 %v1146, %v1158
        %v1161 = vpack.c.bf16 %v1159, %v1159
        %v1162 = vpack.c.bf16 %v1160, %v1160
        %s1163 = scalar_lea.vmem %s390, 320
        %v1164 = vld [vmem:[%s1163] sm:$0xff]
        %v1165 = vld [vmem:[%s1163 + $0x8] sm:$0xff]
        %v1166 = vld [vmem:[%s1163 + $0x10] sm:$0xff]
        %v1167 = vld [vmem:[%s1163 + $0x18] sm:$0xff]
        %v1168 = vld [vmem:[%s1163 + $0x20] sm:$0xff]
        %v1169 = vld [vmem:[%s1163 + $0x28] sm:$0xff]
        %v1170 = vld [vmem:[%s1163 + $0x30] sm:$0xff]
        %v1171 = vld [vmem:[%s1163 + $0x38] sm:$0xff]
        %v1180 = vunpack.c.l.b16 %v1164
        %v1181 = vunpack.c.h.b16 %v1164
        %v1182 = vunpack.c.l.b16 %v1165
        %v1183 = vunpack.c.h.b16 %v1165
        %v1184 = vunpack.c.l.b16 %v1166
        %v1185 = vunpack.c.h.b16 %v1166
        %v1186 = vunpack.c.l.b16 %v1167
        %v1187 = vunpack.c.h.b16 %v1167
        %v1188 = vunpack.c.l.b16 %v1168
        %v1189 = vunpack.c.h.b16 %v1168
        %v1190 = vunpack.c.l.b16 %v1169
        %v1191 = vunpack.c.h.b16 %v1169
        %v1192 = vunpack.c.l.b16 %v1170
        %v1193 = vunpack.c.h.b16 %v1170
        %v1194 = vunpack.c.l.b16 %v1171
        %v1195 = vunpack.c.h.b16 %v1171
        %v1196 = vpack.c.b16 %v1182, %v1180
        %v1197 = vpack.c.b16 %v1183, %v1181
        %v1198 = vpack.c.b16 %v1186, %v1184
        %v1199 = vpack.c.b16 %v1187, %v1185
        %v1200 = vpack.c.b16 %v1190, %v1188
        %v1201 = vpack.c.b16 %v1191, %v1189
        %v1202 = vpack.c.b16 %v1194, %v1192
        %v1203 = vpack.c.b16 %v1195, %v1193
        %v1209 = vsel %vm553, %v1162, 0
        %v1212 = vsel %vm553, %v1197, 0
        %v1215 = vsel %vm553, %v1199, 0
        %v1218 = vsel %vm553, %v1201, 0
        %v1221 = vsel %vm553, %v1203, 0
        %1223 = vmatprep.subr.bf16.mxu0 %v1212
        %1224 = vmatpush1.bf16.xpose.msra.mxu0 %v1196
        %1225 = vmatprep.subr.bf16.mxu0 %v1215
        %1226 = vmatpush1.bf16.xpose.msra.mxu0 %v1198
        %1227 = vmatprep.subr.bf16.mxu0 %v1218
        %1228 = vmatpush1.bf16.xpose.msra.mxu0 %v1200
        %1229 = vmatprep.subr.bf16.mxu0 %v1221
        %1230 = vmatpush1.bf16.xpose.msra.mxu0 %v1202
        %1231 = vmatprep.subr.bf16.mxu0 0
        %1232 = vmatpush1.bf16.xpose.msra.mxu0 0
        %1233 = vmatprep.subr.bf16.mxu0 0
        %1234 = vmatpush1.bf16.xpose.msra.mxu0 0
        %1235 = vmatprep.subr.bf16.mxu0 0
        %1236 = vmatpush1.bf16.xpose.msra.mxu0 0
        %1237 = vmatprep.subr.bf16.mxu0 0
        %1238 = vmatpush1.bf16.xpose.msra.mxu0 0
        %1239 = vmatprep.subr.bf16.mxu0 0
        %1240 = vmatpush1.bf16.xpose.msra.mxu0 0
        %1241 = vmatprep.subr.bf16.mxu0 0
        %1242 = vmatpush1.bf16.xpose.msra.mxu0 0
        %1243 = vmatprep.subr.bf16.mxu0 0
        %1244 = vmatpush1.bf16.xpose.msra.mxu0 0
        %1245 = vmatprep.subr.bf16.mxu0 0
        %1246 = vmatpush1.bf16.xpose.msra.mxu0 0
        %1247 = vmatprep.subr.bf16.mxu0 0
        %1248 = vmatpush1.bf16.xpose.msra.mxu0 0
        %1249 = vmatprep.subr.bf16.mxu0 0
        %1250 = vmatpush1.bf16.xpose.msra.mxu0 0
        %1251 = vmatprep.subr.bf16.mxu0 0
        %1252 = vmatpush1.bf16.xpose.msra.mxu0 0
        %1253 = vmatprep.subr.bf16.mxu0 0
        %1254 = vmatpush1.bf16.xpose.msra.mxu0 0
        %1255 = vmatprep.mubr.bf16.mxu0 %v1209
        %1256 = vmatmul.mubr.bf16.gmra.mrb[0].mxu0 %v1161
        %v1257 = vpop.f32.mrb[0].mxu0
        %v1258 = vadd.f32 0.0, %v1257
        %v1259 = vpop.f32.mrb[0].mxu0
        %v1260 = vpop.f32.mrb[0].mxu0
        %v1261 = vpop.f32.mrb[0].mxu0
        %1262 = vdwg.mxu0
        %v1263 = vadd.f32 %v1122, %v1258
        %s1264 = sadd.s32 %s420, 6
        %s1265 = smul.u32 %s1264, 3
        %s1266 = sld [smem:[#allocation4 + %s1265]]
        %s1267 = sadd.s32 %s1265, 1
        %s1268 = sld [smem:[#allocation4 + %s1267]]
        %s1269 = sadd.s32 %s1265, 2
        %s1270 = sld [smem:[#allocation4 + %s1269]]
        %s1271 = sld [smem:[#allocation6 + %s1264]]
        %v1272 = vstv %s1266
        %v1273 = vmul.f32 %v403, %v1272
        %v1274 = vmul.f32 %v404, %v1272
        %v1275 = vstv %s1268
        %v1276 = vmul.f32 %v406, %v1275
        %v1277 = vmul.f32 %v407, %v1275
        %v1278 = vadd.f32 %v1273, %v1276
        %v1279 = vadd.f32 %v1274, %v1277
        %v1280 = vstv %s1270
        %v1281 = vmul.f32 %v409, %v1280
        %v1282 = vmul.f32 %v410, %v1280
        %v1283 = vadd.f32 %v1278, %v1281
        %v1284 = vadd.f32 %v1279, %v1282
        %v1285 = vstv %s1271
        %v1286 = vadd.f32 %v1283, %v1285
        %v1287 = vadd.f32 %v1284, %v1285
        %v1288 = vmul.f32 %v412, %v1272
        %v1289 = vmul.f32 %v413, %v1272
        %v1290 = vmul.f32 %v415, %v1275
        %v1291 = vmul.f32 %v416, %v1275
        %v1292 = vadd.f32 %v1288, %v1290
        %v1293 = vadd.f32 %v1289, %v1291
        %v1294 = vmul.f32 %v418, %v1280
        %v1295 = vmul.f32 %v419, %v1280
        %v1296 = vadd.f32 %v1292, %v1294
        %v1297 = vadd.f32 %v1293, %v1295
        %v1298 = vadd.f32 %v1296, %v1285
        %v1299 = vadd.f32 %v1297, %v1285
        %v1300 = vmax.f32 %v1286, %v1298
        %v1301 = vmax.f32 %v1287, %v1299
        %v1302 = vpack.c.bf16 %v1300, %v1300
        %v1303 = vpack.c.bf16 %v1301, %v1301
        %s1304 = scalar_lea.vmem %s390, 384
        %v1305 = vld [vmem:[%s1304] sm:$0xff]
        %v1306 = vld [vmem:[%s1304 + $0x8] sm:$0xff]
        %v1307 = vld [vmem:[%s1304 + $0x10] sm:$0xff]
        %v1308 = vld [vmem:[%s1304 + $0x18] sm:$0xff]
        %v1309 = vld [vmem:[%s1304 + $0x20] sm:$0xff]
        %v1310 = vld [vmem:[%s1304 + $0x28] sm:$0xff]
        %v1311 = vld [vmem:[%s1304 + $0x30] sm:$0xff]
        %v1312 = vld [vmem:[%s1304 + $0x38] sm:$0xff]
        %v1321 = vunpack.c.l.b16 %v1305
        %v1322 = vunpack.c.h.b16 %v1305
        %v1323 = vunpack.c.l.b16 %v1306
        %v1324 = vunpack.c.h.b16 %v1306
        %v1325 = vunpack.c.l.b16 %v1307
        %v1326 = vunpack.c.h.b16 %v1307
        %v1327 = vunpack.c.l.b16 %v1308
        %v1328 = vunpack.c.h.b16 %v1308
        %v1329 = vunpack.c.l.b16 %v1309
        %v1330 = vunpack.c.h.b16 %v1309
        %v1331 = vunpack.c.l.b16 %v1310
        %v1332 = vunpack.c.h.b16 %v1310
        %v1333 = vunpack.c.l.b16 %v1311
        %v1334 = vunpack.c.h.b16 %v1311
        %v1335 = vunpack.c.l.b16 %v1312
        %v1336 = vunpack.c.h.b16 %v1312
        %v1337 = vpack.c.b16 %v1323, %v1321
        %v1338 = vpack.c.b16 %v1324, %v1322
        %v1339 = vpack.c.b16 %v1327, %v1325
        %v1340 = vpack.c.b16 %v1328, %v1326
        %v1341 = vpack.c.b16 %v1331, %v1329
        %v1342 = vpack.c.b16 %v1332, %v1330
        %v1343 = vpack.c.b16 %v1335, %v1333
        %v1344 = vpack.c.b16 %v1336, %v1334
        %v1350 = vsel %vm553, %v1303, 0
        %v1353 = vsel %vm553, %v1338, 0
        %v1356 = vsel %vm553, %v1340, 0
        %v1359 = vsel %vm553, %v1342, 0
        %v1362 = vsel %vm553, %v1344, 0
        %1364 = vmatprep.subr.bf16.mxu0 %v1353
        %1365 = vmatpush1.bf16.xpose.msra.mxu0 %v1337
        %1366 = vmatprep.subr.bf16.mxu0 %v1356
        %1367 = vmatpush1.bf16.xpose.msra.mxu0 %v1339
        %1368 = vmatprep.subr.bf16.mxu0 %v1359
        %1369 = vmatpush1.bf16.xpose.msra.mxu0 %v1341
        %1370 = vmatprep.subr.bf16.mxu0 %v1362
        %1371 = vmatpush1.bf16.xpose.msra.mxu0 %v1343
        %1372 = vmatprep.subr.bf16.mxu0 0
        %1373 = vmatpush1.bf16.xpose.msra.mxu0 0
        %1374 = vmatprep.subr.bf16.mxu0 0
        %1375 = vmatpush1.bf16.xpose.msra.mxu0 0
        %1376 = vmatprep.subr.bf16.mxu0 0
        %1377 = vmatpush1.bf16.xpose.msra.mxu0 0
        %1378 = vmatprep.subr.bf16.mxu0 0
        %1379 = vmatpush1.bf16.xpose.msra.mxu0 0
        %1380 = vmatprep.subr.bf16.mxu0 0
        %1381 = vmatpush1.bf16.xpose.msra.mxu0 0
        %1382 = vmatprep.subr.bf16.mxu0 0
        %1383 = vmatpush1.bf16.xpose.msra.mxu0 0
        %1384 = vmatprep.subr.bf16.mxu0 0
        %1385 = vmatpush1.bf16.xpose.msra.mxu0 0
        %1386 = vmatprep.subr.bf16.mxu0 0
        %1387 = vmatpush1.bf16.xpose.msra.mxu0 0
        %1388 = vmatprep.subr.bf16.mxu0 0
        %1389 = vmatpush1.bf16.xpose.msra.mxu0 0
        %1390 = vmatprep.subr.bf16.mxu0 0
        %1391 = vmatpush1.bf16.xpose.msra.mxu0 0
        %1392 = vmatprep.subr.bf16.mxu0 0
        %1393 = vmatpush1.bf16.xpose.msra.mxu0 0
        %1394 = vmatprep.subr.bf16.mxu0 0
        %1395 = vmatpush1.bf16.xpose.msra.mxu0 0
        %1396 = vmatprep.mubr.bf16.mxu0 %v1350
        %1397 = vmatmul.mubr.bf16.gmra.mrb[0].mxu0 %v1302
        %v1398 = vpop.f32.mrb[0].mxu0
        %v1399 = vadd.f32 0.0, %v1398
        %v1400 = vpop.f32.mrb[0].mxu0
        %v1401 = vpop.f32.mrb[0].mxu0
        %v1402 = vpop.f32.mrb[0].mxu0
        %1403 = vdwg.mxu0
        %v1404 = vadd.f32 %v1263, %v1399
        %s1405 = sadd.s32 %s420, 7
        %s1406 = smul.u32 %s1405, 3
        %s1407 = sld [smem:[#allocation4 + %s1406]]
        %s1408 = sadd.s32 %s1406, 1
        %s1409 = sld [smem:[#allocation4 + %s1408]]
        %s1410 = sadd.s32 %s1406, 2
        %s1411 = sld [smem:[#allocation4 + %s1410]]
        %s1412 = sld [smem:[#allocation6 + %s1405]]
        %v1413 = vstv %s1407
        %v1414 = vmul.f32 %v403, %v1413
        %v1415 = vmul.f32 %v404, %v1413
        %v1416 = vstv %s1409
        %v1417 = vmul.f32 %v406, %v1416
        %v1418 = vmul.f32 %v407, %v1416
        %v1419 = vadd.f32 %v1414, %v1417
        %v1420 = vadd.f32 %v1415, %v1418
        %v1421 = vstv %s1411
        %v1422 = vmul.f32 %v409, %v1421
        %v1423 = vmul.f32 %v410, %v1421
        %v1424 = vadd.f32 %v1419, %v1422
        %v1425 = vadd.f32 %v1420, %v1423
        %v1426 = vstv %s1412
        %v1427 = vadd.f32 %v1424, %v1426
        %v1428 = vadd.f32 %v1425, %v1426
        %v1429 = vmul.f32 %v412, %v1413
        %v1430 = vmul.f32 %v413, %v1413
        %v1431 = vmul.f32 %v415, %v1416
        %v1432 = vmul.f32 %v416, %v1416
        %v1433 = vadd.f32 %v1429, %v1431
        %v1434 = vadd.f32 %v1430, %v1432
        %v1435 = vmul.f32 %v418, %v1421
        %v1436 = vmul.f32 %v419, %v1421
        %v1437 = vadd.f32 %v1433, %v1435
        %v1438 = vadd.f32 %v1434, %v1436
        %v1439 = vadd.f32 %v1437, %v1426
        %v1440 = vadd.f32 %v1438, %v1426
        %v1441 = vmax.f32 %v1427, %v1439
        %v1442 = vmax.f32 %v1428, %v1440
        %v1443 = vpack.c.bf16 %v1441, %v1441
        %v1444 = vpack.c.bf16 %v1442, %v1442
        %s1445 = scalar_lea.vmem %s390, 448
        %v1446 = vld [vmem:[%s1445] sm:$0xff]
        %v1447 = vld [vmem:[%s1445 + $0x8] sm:$0xff]
        %v1448 = vld [vmem:[%s1445 + $0x10] sm:$0xff]
        %v1449 = vld [vmem:[%s1445 + $0x18] sm:$0xff]
        %v1450 = vld [vmem:[%s1445 + $0x20] sm:$0xff]
        %v1451 = vld [vmem:[%s1445 + $0x28] sm:$0xff]
        %v1452 = vld [vmem:[%s1445 + $0x30] sm:$0xff]
        %v1453 = vld [vmem:[%s1445 + $0x38] sm:$0xff]
        %v1462 = vunpack.c.l.b16 %v1446
        %v1463 = vunpack.c.h.b16 %v1446
        %v1464 = vunpack.c.l.b16 %v1447
        %v1465 = vunpack.c.h.b16 %v1447
        %v1466 = vunpack.c.l.b16 %v1448
        %v1467 = vunpack.c.h.b16 %v1448
        %v1468 = vunpack.c.l.b16 %v1449
        %v1469 = vunpack.c.h.b16 %v1449
        %v1470 = vunpack.c.l.b16 %v1450
        %v1471 = vunpack.c.h.b16 %v1450
        %v1472 = vunpack.c.l.b16 %v1451
        %v1473 = vunpack.c.h.b16 %v1451
        %v1474 = vunpack.c.l.b16 %v1452
        %v1475 = vunpack.c.h.b16 %v1452
        %v1476 = vunpack.c.l.b16 %v1453
        %v1477 = vunpack.c.h.b16 %v1453
        %v1478 = vpack.c.b16 %v1464, %v1462
        %v1479 = vpack.c.b16 %v1465, %v1463
        %v1480 = vpack.c.b16 %v1468, %v1466
        %v1481 = vpack.c.b16 %v1469, %v1467
        %v1482 = vpack.c.b16 %v1472, %v1470
        %v1483 = vpack.c.b16 %v1473, %v1471
        %v1484 = vpack.c.b16 %v1476, %v1474
        %v1485 = vpack.c.b16 %v1477, %v1475
        %v1491 = vsel %vm553, %v1444, 0
        %v1494 = vsel %vm553, %v1479, 0
        %v1497 = vsel %vm553, %v1481, 0
        %v1500 = vsel %vm553, %v1483, 0
        %v1503 = vsel %vm553, %v1485, 0
        %1505 = vmatprep.subr.bf16.mxu0 %v1494
        %1506 = vmatpush1.bf16.xpose.msra.mxu0 %v1478
        %1507 = vmatprep.subr.bf16.mxu0 %v1497
        %1508 = vmatpush1.bf16.xpose.msra.mxu0 %v1480
        %1509 = vmatprep.subr.bf16.mxu0 %v1500
        %1510 = vmatpush1.bf16.xpose.msra.mxu0 %v1482
        %1511 = vmatprep.subr.bf16.mxu0 %v1503
        %1512 = vmatpush1.bf16.xpose.msra.mxu0 %v1484
        %1513 = vmatprep.subr.bf16.mxu0 0
        %1514 = vmatpush1.bf16.xpose.msra.mxu0 0
        %1515 = vmatprep.subr.bf16.mxu0 0
        %1516 = vmatpush1.bf16.xpose.msra.mxu0 0
        %1517 = vmatprep.subr.bf16.mxu0 0
        %1518 = vmatpush1.bf16.xpose.msra.mxu0 0
        %1519 = vmatprep.subr.bf16.mxu0 0
        %1520 = vmatpush1.bf16.xpose.msra.mxu0 0
        %1521 = vmatprep.subr.bf16.mxu0 0
        %1522 = vmatpush1.bf16.xpose.msra.mxu0 0
        %1523 = vmatprep.subr.bf16.mxu0 0
        %1524 = vmatpush1.bf16.xpose.msra.mxu0 0
        %1525 = vmatprep.subr.bf16.mxu0 0
        %1526 = vmatpush1.bf16.xpose.msra.mxu0 0
        %1527 = vmatprep.subr.bf16.mxu0 0
        %1528 = vmatpush1.bf16.xpose.msra.mxu0 0
        %1529 = vmatprep.subr.bf16.mxu0 0
        %1530 = vmatpush1.bf16.xpose.msra.mxu0 0
        %1531 = vmatprep.subr.bf16.mxu0 0
        %1532 = vmatpush1.bf16.xpose.msra.mxu0 0
        %1533 = vmatprep.subr.bf16.mxu0 0
        %1534 = vmatpush1.bf16.xpose.msra.mxu0 0
        %1535 = vmatprep.subr.bf16.mxu0 0
        %1536 = vmatpush1.bf16.xpose.msra.mxu0 0
        %1537 = vmatprep.mubr.bf16.mxu0 %v1491
        %1538 = vmatmul.mubr.bf16.gmra.mrb[0].mxu0 %v1443
        %v1539 = vpop.f32.mrb[0].mxu0
        %v1540 = vadd.f32 0.0, %v1539
        %v1541 = vpop.f32.mrb[0].mxu0
        %v1542 = vpop.f32.mrb[0].mxu0
        %v1543 = vpop.f32.mrb[0].mxu0
        %1544 = vdwg.mxu0
        %v1545 = vadd.f32 %v1404, %v1540
        %v1546 = vld [vmem:[#allocation2] sm:$0xff]
        %v1547 = vadd.f32 %v1546, %v1545
        %vm1548 = vcmask 523264
        %1549 = vst.msk [vmem:[#allocation2] sm:$0xff] %vm1548, %v1547
        %p1550 = scmp.eq.s32.totalorder %s28, 3
        // Predicated region
        $region69: #{mynet_forward.1} parent=55 // pred_check
          %p1551 = pneg %p1550
        $region70: #{mynet_forward.1} parent=55 // pred_check_branch
          %1553 = sbr.rel (%p1551) target = $region72
        $region71: #{mynet_forward.1} parent=55 // pred_region
          %v1554 = vld [vmem:[#allocation2] sm:$0xff]
          %v1555 = vld [vmem:[%s4] sm:$0x1]
          %v1557 = vlaneseq
          %v1558 = vshrl.u32 %v1557, 7
          %v1559 = vsub.s32 0, %v1558
          %v1560 = vrot.slane %v1555, %v1559
          %v1562 = vadd.f32 %v1554, %v1560
          %v1563 = vmax.f32 %v1562, 0.0
          %v1564 = vld [vmem:[%s5] sm:$0xff]
          %v1565 = vld [vmem:[%s5 + $0x8] sm:$0xff]
          %v1566 = vld [vmem:[%s5 + $0x10] sm:$0xff]
          %v1567 = vld [vmem:[%s5 + $0x18] sm:$0xff]
          %v1568 = vld [vmem:[%s5 + $0x20] sm:$0xff]
          %v1569 = vld [vmem:[%s5 + $0x28] sm:$0xff]
          %v1570 = vld [vmem:[%s5 + $0x30] sm:$0xff]
          %v1571 = vld [vmem:[%s5 + $0x38] sm:$0xff]
          %v1572 = vld [vmem:[%s6] sm:$0x1]
          %v1574 = vlaneseq
          %v1575 = vshrl.u32 %v1574, 7
          %v1576 = vsub.s32 0, %v1575
          %v1577 = vrot.slane %v1572, %v1576
          %v1580 = vsel %vm1548, %v1563, 0
          %1582 = vmatprep.subr.mxu0 0.0
          %1583 = vmatpush1.msra.mxu0 %v1564
          %1584 = vmatprep.subr.mxu0 0.0
          %1585 = vmatpush1.msra.mxu0 %v1565
          %1586 = vmatprep.subr.mxu0 0.0
          %1587 = vmatpush1.msra.mxu0 %v1566
          %1588 = vmatprep.subr.mxu0 0.0
          %1589 = vmatpush1.msra.mxu0 %v1567
          %1590 = vmatprep.subr.mxu0 0.0
          %1591 = vmatpush1.msra.mxu0 %v1568
          %1592 = vmatprep.subr.mxu0 0.0
          %1593 = vmatpush1.msra.mxu0 %v1569
          %1594 = vmatprep.subr.mxu0 0.0
          %1595 = vmatpush1.msra.mxu0 %v1570
          %1596 = vmatprep.subr.mxu0 0.0
          %1597 = vmatpush1.msra.mxu0 %v1571
          %1598 = vmatprep.subr.mxu0 0.0
          %1599 = vmatpush1.msra.mxu0 0.0
          %1600 = vmatprep.subr.mxu0 0.0
          %1601 = vmatpush1.msra.mxu0 0.0
          %1602 = vmatprep.subr.mxu0 0.0
          %1603 = vmatpush1.msra.mxu0 0.0
          %1604 = vmatprep.subr.mxu0 0.0
          %1605 = vmatpush1.msra.mxu0 0.0
          %1606 = vmatprep.subr.mxu0 0.0
          %1607 = vmatpush1.msra.mxu0 0.0
          %1608 = vmatprep.subr.mxu0 0.0
          %1609 = vmatpush1.msra.mxu0 0.0
          %1610 = vmatprep.subr.mxu0 0.0
          %1611 = vmatpush1.msra.mxu0 0.0
          %1612 = vmatprep.subr.mxu0 0.0
          %1613 = vmatpush1.msra.mxu0 0.0
          %1614 = vmatprep.subr.mxu0 0.0
          %1615 = vmatpush1.msra.mxu0 0.0
          %1616 = vmatprep.subr.mxu0 0.0
          %1617 = vmatpush1.msra.mxu0 0.0
          %1618 = vmatprep.subr.mxu0 0.0
          %1619 = vmatpush1.msra.mxu0 0.0
          %1620 = vmatprep.subr.mxu0 0.0
          %1621 = vmatpush1.msra.mxu0 0.0
          %1622 = vmatprep.subr.mxu0 0.0
          %1623 = vmatpush1.msra.mxu0 0.0
          %1624 = vmatprep.subr.mxu0 0.0
          %1625 = vmatpush1.msra.mxu0 0.0
          %1626 = vmatprep.subr.mxu0 0.0
          %1627 = vmatpush1.msra.mxu0 0.0
          %1628 = vmatprep.subr.mxu0 0.0
          %1629 = vmatpush1.msra.mxu0 0.0
          %1630 = vmatprep.subr.mxu0 0.0
          %1631 = vmatpush1.msra.mxu0 0.0
          %1632 = vmatprep.subr.mxu0 0.0
          %1633 = vmatpush1.msra.mxu0 0.0
          %1634 = vmatprep.subr.mxu0 0.0
          %1635 = vmatpush1.msra.mxu0 0.0
          %1636 = vmatprep.subr.mxu0 0.0
          %1637 = vmatpush1.msra.mxu0 0.0
          %1638 = vmatprep.subr.mxu0 0.0
          %1639 = vmatpush1.msra.mxu0 0.0
          %1640 = vmatprep.subr.mxu0 0.0
          %1641 = vmatpush1.msra.mxu0 0.0
          %1642 = vmatprep.subr.mxu0 0.0
          %1643 = vmatpush1.msra.mxu0 0.0
          %1644 = vmatprep.subr.mxu0 0.0
          %1645 = vmatpush1.msra.mxu0 0.0
          %1646 = vmatprep.mubr.f32.mxu0 0.0
          %1647 = vmatmul.mubr.f32.gmra.mrb[0].mxu0 %v1580
          %v1648 = vpop.f32.mrb[0].mxu0
          %v1649 = vadd.f32 %v1577, %v1648
          %v1650 = vpop.f32.mrb[0].mxu0
          %1651 = vdwg.mxu0
          %v1652 = vmax.f32 %v1649, 0.0
          %v1653 = vand.u32 2147483647, %v1649
          %v1654 = vsub.f32 0.0, %v1653
          %v1655 = vmul.f32 %v1654, 1.442695
          %v1656 = vpow.pop %v1655
          %v1657 = vadd.f32 %v1656, 1.0
          %v1658 = vlog2.pop %v1657
          %v1659 = vmul.f32 %v1658, 0.6931472
          %v1660 = vadd.f32 %v1652, %v1659
          %v1661 = vld [vmem:[%s7] sm:$0x1]
          %v1663 = vlaneseq
          %v1664 = vshrl.u32 %v1663, 7
          %v1665 = vsub.s32 0, %v1664
          %v1666 = vrot.slane %v1661, %v1665
          %v1668 = vmul.f32 %v1660, %v1666
          %vm1669 = vcmask 261120
          %v1670 = vsel %vm1669, %v1668, 0.0
          %1671 = vadd.xlane.f32.xlu0 %v1670
          %v1672 = vpop.xlane.xlu0 %1671
          %s1673 = sld [smem:[#allocation3]]
          %v1674 = vstv %s1673
          %v1675 = vadd.f32 %v1672, %v1674
          %vm1676 = vcmask 7168
          %1677 = vst.msk [vmem:[%s395] sm:$0xff] %vm1676, %v1675
        $region72: #{mynet_forward.1} parent=55 // pred_fallthru
          _
        %p1678 = scmp.lt.s32.totalorder %s27, 0
        %s1679 = scalar_select %p1678, %s27, 0
        %s1680 = smul.addr %s1679, 8
        %s1681 = scalar_lea.vmem %s9, %s1680
        // Predicated region
        $region73: #{mynet_forward.1} parent=55 // pred_check
          %p1682 = pneg %p252
        $region74: #{mynet_forward.1} parent=55 // pred_check_branch
          %1684 = sbr.rel (%p1682) target = $region76
        $region75: #{mynet_forward.1} parent=55 // pred_region
          _
        $region76: #{mynet_forward.1} parent=55 // pred_fallthru
          _
        // Predicated region
        $region77: #{mynet_forward.1} parent=55 // pred_check
          %p1685 = pneg %p252
        $region78: #{mynet_forward.1} parent=55 // pred_check_branch
          %1687 = sbr.rel (%p1685) target = $region80
        $region79: #{mynet_forward.1} parent=55 // pred_region
          %p1688 = scmp.lt.s32.totalorder %s27, 0
          %s1689 = scalar_select %p1688, %s27, 0
          %s1690 = smul.addr %s1689, 8
          %s1691 = scalar_lea.vmem %s9, %s1690
        $region80: #{mynet_forward.1} parent=55 // pred_fallthru
          _
      $region56: #{mynet_forward.1} parent=5 // pred_fallthru
        _
      %p1692 = scmp.le.s32.totalorder 2, %s18
      // Predicated region
      $region81: #{mynet_forward.1} parent=5 // pred_check
        %p1693 = pneg %p1692
      $region82: #{mynet_forward.1} parent=5 // pred_check_branch
        %1695 = sbr.rel (%p1693) target = $region84
      $region83: #{mynet_forward.1} parent=5 // pred_region
        %s1696 = ssub.s32 %s18, 2
      $region84: #{mynet_forward.1} parent=5 // pred_fallthru
        _
    $region6: #{mynet_forward.1} parent=1 // loop_footer
      %s22 = sadd.s32 1, %s18
    $region7: #{mynet_forward.1} parent=1 // loop_footer_branch
      %17 = sbr.rel target = $region3
    $region8: #{mynet_forward.1} parent=1 // loop_exit
      _
    %1697 = vsyncpa [#allocation5], 1
    %s1698 = scalar_lea.sflag [#allocation5], 1
    %1699 = vsyncpa %s1698, 1
    %1700 = vsyncpa [#allocation7], 1

</llo_original>
